<compile_context>
chip_gen: v6e
topology: v6e:2x2x1
jax: 0.10.0
libtpu: 0.0.40
codegen_flags: <defaults>
</compile_context>

<pallas_src>
import functools
import math

import jax
import jax.numpy as jnp
from jax import lax
from jax.experimental import pallas as pl
from jax.experimental.pallas import tpu as pltpu


# ---------------------------------------------------------------------------
# Kernels
# ---------------------------------------------------------------------------

def _qkv_proj_kernel(x_ref, pos_ref, wqk_ref, bqk_ref, wv_ref, bv_ref,
                     q_ref, k_ref, v_ref, *, d_model):
    """q/k = (x + pos) @ [w_q | w_k] + b ;  v = x @ w_v + b_v   (one launch)."""
    x = x_ref[...].astype(jnp.float32)
    xp = x + pos_ref[...].astype(jnp.float32)
    qk = jnp.dot(xp, wqk_ref[...], preferred_element_type=jnp.float32) + bqk_ref[...]
    q_ref[...] = qk[:, :d_model].astype(q_ref.dtype)
    k_ref[...] = qk[:, d_model:2 * d_model].astype(k_ref.dtype)
    v = jnp.dot(x, wv_ref[...], preferred_element_type=jnp.float32) + bv_ref[...]
    v_ref[...] = v.astype(v_ref.dtype)


def _attn_out_ln_kernel(q_ref, k_ref, v_ref, res_ref, wo_ref, bo_ref,
                        g_ref, beta_ref, o_ref, *, nhead, eps):
    """Per-batch multi-head attention + out-proj + residual + LayerNorm.

    q/k/v/res blocks are (1, S, E); output block is lane-dense (1, S, E).
    """
    S, E = q_ref.shape[1], q_ref.shape[2]
    hd = E // nhead
    scale = 1.0 / math.sqrt(hd)

    q = q_ref[0].astype(jnp.float32) * scale          # fold scale into Q
    k = k_ref[0].astype(jnp.float32)
    v = v_ref[0].astype(jnp.float32)

    ctx_heads = []
    for h in range(nhead):                            # static unroll over heads
        qh = q[:, h * hd:(h + 1) * hd]
        kh = k[:, h * hd:(h + 1) * hd]
        vh = v[:, h * hd:(h + 1) * hd]
        # contract last dims directly (no explicit transpose of k)
        s = lax.dot_general(qh, kh, (((1,), (1,)), ((), ())),
                            preferred_element_type=jnp.float32)        # (S, S)
        s = s - jnp.max(s, axis=-1, keepdims=True)
        e = jnp.exp(s)
        p = e * pl.reciprocal(jnp.sum(e, axis=-1, keepdims=True), approx=True)
        ctx_heads.append(jnp.dot(p, vh, preferred_element_type=jnp.float32))
    ctx = jnp.concatenate(ctx_heads, axis=-1)                          # (S, E)

    attn = jnp.dot(ctx, wo_ref[...], preferred_element_type=jnp.float32) + bo_ref[...]
    z = res_ref[0].astype(jnp.float32) + attn
    mean = jnp.mean(z, axis=-1, keepdims=True)
    var = jnp.mean((z - mean) ** 2, axis=-1, keepdims=True)
    zn = (z - mean) * lax.rsqrt(var + eps)
    o_ref[0] = (zn * g_ref[...] + beta_ref[...]).astype(o_ref.dtype)


def _ffn_ln_kernel(x_ref, w1_ref, b1_ref, w2_ref, b2_ref, g_ref, beta_ref,
                   o_ref, *, eps):
    """FFN (linear1 + ReLU + linear2) + residual + LayerNorm, one launch."""
    x = x_ref[...].astype(jnp.float32)
    h = jnp.dot(x, w1_ref[...], preferred_element_type=jnp.float32) + b1_ref[...]
    h = jnp.maximum(h, 0.0)
    y = jnp.dot(h, w2_ref[...], preferred_element_type=jnp.float32) + b2_ref[...]
    z = x + y
    mean = jnp.mean(z, axis=-1, keepdims=True)
    var = jnp.mean((z - mean) ** 2, axis=-1, keepdims=True)
    zn = (z - mean) * lax.rsqrt(var + eps)
    o_ref[...] = (zn * g_ref[...] + beta_ref[...]).astype(o_ref.dtype)


def _ln_kernel(x_ref, g_ref, beta_ref, o_ref, *, eps):
    x = x_ref[...].astype(jnp.float32)
    mean = jnp.mean(x, axis=-1, keepdims=True)
    var = jnp.mean((x - mean) ** 2, axis=-1, keepdims=True)
    xn = (x - mean) * lax.rsqrt(var + eps)
    o_ref[...] = (xn * g_ref[...] + beta_ref[...]).astype(o_ref.dtype)


# ---------------------------------------------------------------------------
# pallas_call wrappers
# ---------------------------------------------------------------------------

_PARALLEL_1D = pltpu.CompilerParams(dimension_semantics=("parallel",))


def _row_tile(n):
    for t in (512, 256, 128, 64, 32, 16, 8):
        if n % t == 0:
            return t
    return n


def qkv_projection(x, pos, w_qk, b_qk, w_v, b_v):
    """x, pos: (N, E) -> q, k, v: (N, E) each."""
    N, E = x.shape
    tm = _row_tile(N)
    flops = int(2 * N * E * 3 * E)
    bytes_acc = int(4 * (2 * N * E + 3 * E * E + 3 * E + 3 * N * E))
    return pl.pallas_call(
        functools.partial(_qkv_proj_kernel, d_model=E),
        out_shape=(jax.ShapeDtypeStruct((N, E), x.dtype),
                   jax.ShapeDtypeStruct((N, E), x.dtype),
                   jax.ShapeDtypeStruct((N, E), x.dtype)),
        grid=(N // tm,),
        in_specs=[
            pl.BlockSpec((tm, E), lambda i: (i, 0)),
            pl.BlockSpec((tm, E), lambda i: (i, 0)),
            pl.BlockSpec((E, 2 * E), lambda i: (0, 0)),
            pl.BlockSpec((1, 2 * E), lambda i: (0, 0)),
            pl.BlockSpec((E, E), lambda i: (0, 0)),
            pl.BlockSpec((1, E), lambda i: (0, 0)),
        ],
        out_specs=(
            pl.BlockSpec((tm, E), lambda i: (i, 0)),
            pl.BlockSpec((tm, E), lambda i: (i, 0)),
            pl.BlockSpec((tm, E), lambda i: (i, 0)),
        ),
        compiler_params=_PARALLEL_1D,
        cost_estimate=pl.CostEstimate(flops=flops, transcendentals=0,
                                      bytes_accessed=bytes_acc),
    )(x, pos, w_qk, b_qk.reshape(1, 2 * E), w_v, b_v.reshape(1, E))


def attention_block(q, k, v, residual, w_o, b_o, gamma, beta, nhead, eps=1e-5):
    """q/k/v/residual: (B, S, E) -> LayerNorm(residual + MHA(q,k,v) @ w_o)."""
    B, S, E = q.shape
    flops = int(B * (4 * S * S * E + 2 * S * E * E))
    trans = int(B * nhead * S * S)
    bytes_acc = int(4 * (5 * B * S * E + E * E + 3 * E))
    return pl.pallas_call(
        functools.partial(_attn_out_ln_kernel, nhead=nhead, eps=eps),
        out_shape=jax.ShapeDtypeStruct((B, S, E), q.dtype),
        grid=(B,),
        in_specs=[
            pl.BlockSpec((1, S, E), lambda b: (b, 0, 0)),
            pl.BlockSpec((1, S, E), lambda b: (b, 0, 0)),
            pl.BlockSpec((1, S, E), lambda b: (b, 0, 0)),
            pl.BlockSpec((1, S, E), lambda b: (b, 0, 0)),
            pl.BlockSpec((E, E), lambda b: (0, 0)),
            pl.BlockSpec((1, E), lambda b: (0, 0)),
            pl.BlockSpec((1, E), lambda b: (0, 0)),
            pl.BlockSpec((1, E), lambda b: (0, 0)),
        ],
        out_specs=pl.BlockSpec((1, S, E), lambda b: (b, 0, 0)),
        compiler_params=_PARALLEL_1D,
        cost_estimate=pl.CostEstimate(flops=flops, transcendentals=trans,
                                      bytes_accessed=bytes_acc),
    )(q, k, v, residual, w_o, b_o.reshape(1, E),
      gamma.reshape(1, E), beta.reshape(1, E))


def ffn_block(x, w1, b1, w2, b2, gamma, beta, eps=1e-5):
    """x: (N, E) -> LayerNorm(x + relu(x@w1+b1)@w2+b2)."""
    N, E = x.shape
    F = w1.shape[1]
    tm = _row_tile(N)
    flops = int(4 * N * E * F)
    bytes_acc = int(4 * (2 * N * E + 2 * E * F + F + 3 * E))
    return pl.pallas_call(
        functools.partial(_ffn_ln_kernel, eps=eps),
        out_shape=jax.ShapeDtypeStruct((N, E), x.dtype),
        grid=(N // tm,),
        in_specs=[
            pl.BlockSpec((tm, E), lambda i: (i, 0)),
            pl.BlockSpec((E, F), lambda i: (0, 0)),
            pl.BlockSpec((1, F), lambda i: (0, 0)),
            pl.BlockSpec((F, E), lambda i: (0, 0)),
            pl.BlockSpec((1, E), lambda i: (0, 0)),
            pl.BlockSpec((1, E), lambda i: (0, 0)),
            pl.BlockSpec((1, E), lambda i: (0, 0)),
        ],
        out_specs=pl.BlockSpec((tm, E), lambda i: (i, 0)),
        compiler_params=_PARALLEL_1D,
        cost_estimate=pl.CostEstimate(flops=flops, transcendentals=0,
                                      bytes_accessed=bytes_acc),
    )(x, w1, b1.reshape(1, F), w2, b2.reshape(1, E),
      gamma.reshape(1, E), beta.reshape(1, E))


def layernorm(x, gamma, beta, eps=1e-5):
    N, E = x.shape
    tm = _row_tile(N)
    return pl.pallas_call(
        functools.partial(_ln_kernel, eps=eps),
        out_shape=jax.ShapeDtypeStruct((N, E), x.dtype),
        grid=(N // tm,),
        in_specs=[
            pl.BlockSpec((tm, E), lambda i: (i, 0)),
            pl.BlockSpec((1, E), lambda i: (0, 0)),
            pl.BlockSpec((1, E), lambda i: (0, 0)),
        ],
        out_specs=pl.BlockSpec((tm, E), lambda i: (i, 0)),
        compiler_params=_PARALLEL_1D,
    )(x, gamma.reshape(1, E), beta.reshape(1, E))


# ---------------------------------------------------------------------------
# Encoder layer / encoder stack (forward_post: normalize_before=False)
# ---------------------------------------------------------------------------

def encoder_layer(x, pos, p, nhead):
    """x, pos: (B, S, E) batch-major.  Returns (B, S, E)."""
    B, S, E = x.shape
    N = B * S
    xf = x.reshape(N, E)
    pf = pos.reshape(N, E)

    # fused pos-add + Q/K/V projections (one launch)
    q, k, v = qkv_projection(xf, pf, p["w_qk"], p["b_qk"], p["w_v"], p["b_v"])
    q = q.reshape(B, S, E)
    k = k.reshape(B, S, E)
    v = v.reshape(B, S, E)

    # fused attention + out-proj + residual + norm1 (one launch)
    x = attention_block(q, k, v, x, p["w_o"], p["b_o"],
                        p["norm1_g"], p["norm1_b"], nhead)

    # fused FFN + residual + norm2 (one launch)
    x = ffn_block(x.reshape(N, E), p["ffn_w1"], p["ffn_b1"],
                  p["ffn_w2"], p["ffn_b2"],
                  p["norm2_g"], p["norm2_b"]).reshape(B, S, E)
    return x


def transformer_encoder(src, layer_params, nhead, pos=None, norm_params=None):
    """src: (S, B, E) (PyTorch batch_first=False).  Returns (S, B, E)."""
    S, B, E = src.shape
    # single layout change for the whole stack: sequence-major -> batch-major
    x = jnp.transpose(src, (1, 0, 2))
    p = jnp.zeros_like(x) if pos is None else jnp.transpose(pos, (1, 0, 2))
    for lp in layer_params:
        x = encoder_layer(x, p, lp, nhead)
    if norm_params is not None:
        x = layernorm(x.reshape(B * S, E),
                      norm_params["g"], norm_params["b"]).reshape(B, S, E)
    return jnp.transpose(x, (1, 0, 2))


# ---------------------------------------------------------------------------
# Deterministic parameter construction
# ---------------------------------------------------------------------------

def make_layer_params(key, d_model, dim_ff):
    ks = jax.random.split(key, 10)
    s = 1.0 / math.sqrt(d_model)
    return {
        # Q and K weights concatenated along the output dim -> one MXU pass
        "w_qk": jax.random.normal(ks[0], (d_model, 2 * d_model), jnp.float32) * s,
        "b_qk": jax.random.normal(ks[1], (2 * d_model,), jnp.float32) * 0.01,
        "w_v": jax.random.normal(ks[2], (d_model, d_model), jnp.float32) * s,
        "b_v": jax.random.normal(ks[3], (d_model,), jnp.float32) * 0.01,
        "w_o": jax.random.normal(ks[4], (d_model, d_model), jnp.float32) * s,
        "b_o": jax.random.normal(ks[5], (d_model,), jnp.float32) * 0.01,
        "ffn_w1": jax.random.normal(ks[6], (d_model, dim_ff), jnp.float32) * s,
        "ffn_b1": jax.random.normal(ks[7], (dim_ff,), jnp.float32) * 0.01,
        "ffn_w2": jax.random.normal(ks[8], (dim_ff, d_model), jnp.float32)
                  / math.sqrt(dim_ff),
        "ffn_b2": jax.random.normal(ks[9], (d_model,), jnp.float32) * 0.01,
        "norm1_g": jnp.ones((d_model,), jnp.float32),
        "norm1_b": jnp.zeros((d_model,), jnp.float32),
        "norm2_g": jnp.ones((d_model,), jnp.float32),
        "norm2_b": jnp.zeros((d_model,), jnp.float32),
    }


def make_encoder_params(key, num_layers, d_model, dim_ff):
    keys = jax.random.split(key, num_layers)
    return [make_layer_params(k, d_model, dim_ff) for k in keys]


if __name__ == "__main__":
    d_model, nhead, dim_ff, num_layers = 32, 4, 64, 2
    S, B = 16, 2     # sequence length, batch

    root = jax.random.PRNGKey(0)
    k_p, k_src, k_pos = jax.random.split(root, 3)

    params = make_encoder_params(k_p, num_layers, d_model, dim_ff)
    src = jax.random.normal(k_src, (S, B, d_model), jnp.float32)
    pos = jax.random.normal(k_pos, (S, B, d_model), jnp.float32)

    fwd = jax.jit(functools.partial(transformer_encoder, nhead=nhead))
    out = fwd(src, params, pos=pos)
    out = jax.block_until_ready(out)
    assert out.shape == (S, B, d_model)
    print("KERNEL_OK")
</pallas_src>

<mosaic_0001>
module attributes {stable_mosaic.version = 11 : i64} {
  func.func @_qkv_proj_kernel(%arg0: i32, %arg1: memref<32x32xf32, #tpu.memory_space<vmem>>, %arg2: memref<32x32xf32, #tpu.memory_space<vmem>>, %arg3: memref<32x64xf32, #tpu.memory_space<vmem>>, %arg4: memref<1x64xf32, #tpu.memory_space<vmem>>, %arg5: memref<32x32xf32, #tpu.memory_space<vmem>>, %arg6: memref<1x32xf32, #tpu.memory_space<vmem>>, %arg7: memref<32x32xf32, #tpu.memory_space<vmem>>, %arg8: memref<32x32xf32, #tpu.memory_space<vmem>>, %arg9: memref<32x32xf32, #tpu.memory_space<vmem>>) attributes {dimension_semantics = [#tpu.dimension_semantics<parallel>], iteration_bounds = array<i64: 1>, scalar_prefetch = 0 : i64, scratch_operands = 0 : i64, tpu.core_type = #tpu.core_type<tc>, window_params = [{transform_indices = @transform_0, window_bounds = array<i64: 32, 32>}, {transform_indices = @transform_1, window_bounds = array<i64: 32, 32>}, {pipeline_mode = #tpu.pipeline_mode<synchronous>, transform_indices = @transform_2, window_bounds = array<i64: 32, 64>}, {pipeline_mode = #tpu.pipeline_mode<synchronous>, transform_indices = @transform_3, window_bounds = array<i64: 1, 64>}, {pipeline_mode = #tpu.pipeline_mode<synchronous>, transform_indices = @transform_4, window_bounds = array<i64: 32, 32>}, {pipeline_mode = #tpu.pipeline_mode<synchronous>, transform_indices = @transform_5, window_bounds = array<i64: 1, 32>}, {transform_indices = @transform_6, window_bounds = array<i64: 32, 32>}, {transform_indices = @transform_7, window_bounds = array<i64: 32, 32>}, {transform_indices = @transform_8, window_bounds = array<i64: 32, 32>}]} {
    %c0 = arith.constant 0 : index
    %c0_0 = arith.constant 0 : index
    %0 = vector.load %arg1[%c0, %c0_0] : memref<32x32xf32, #tpu.memory_space<vmem>>, vector<32x32xf32>
    %c0_1 = arith.constant 0 : index
    %c0_2 = arith.constant 0 : index
    %1 = vector.load %arg2[%c0_1, %c0_2] : memref<32x32xf32, #tpu.memory_space<vmem>>, vector<32x32xf32>
    %2 = arith.addf %0, %1 : vector<32x32xf32>
    %c0_3 = arith.constant 0 : index
    %c0_4 = arith.constant 0 : index
    %3 = vector.load %arg3[%c0_3, %c0_4] : memref<32x64xf32, #tpu.memory_space<vmem>>, vector<32x64xf32>
    %cst = arith.constant dense<0.000000e+00> : vector<32x64xf32>
    %4 = tpu.matmul %2, %3, %cst {dimension_numbers = #tpu.dot_dimension_numbers<[1], [0], [0], [1], [0, 0, 1, 1], [], []>} : vector<32x32xf32>, vector<32x64xf32>, vector<32x64xf32> -> vector<32x64xf32>
    %c0_5 = arith.constant 0 : index
    %c0_6 = arith.constant 0 : index
    %5 = vector.load %arg4[%c0_5, %c0_6] : memref<1x64xf32, #tpu.memory_space<vmem>>, vector<1x64xf32>
    %6 = vector.broadcast %5 : vector<1x64xf32> to vector<32x64xf32>
    %7 = arith.addf %4, %6 : vector<32x64xf32>
    %8 = vector.extract_strided_slice %7 {offsets = [0, 0], sizes = [32, 32], strides = [1, 1]} : vector<32x64xf32> to vector<32x32xf32>
    %c0_7 = arith.constant 0 : index
    %c0_8 = arith.constant 0 : index
    %9 = vector.load %arg7[%c0_7, %c0_8] : memref<32x32xf32, #tpu.memory_space<vmem>>, vector<32x32xf32>
    tpu.vector_store %arg7[%c0_7, %c0_8], %8 {strides = array<i32>} : memref<32x32xf32, #tpu.memory_space<vmem>>, vector<32x32xf32>,
    %10 = vector.extract_strided_slice %7 {offsets = [0, 32], sizes = [32, 32], strides = [1, 1]} : vector<32x64xf32> to vector<32x32xf32>
    %c0_9 = arith.constant 0 : index
    %c0_10 = arith.constant 0 : index
    %11 = vector.load %arg8[%c0_9, %c0_10] : memref<32x32xf32, #tpu.memory_space<vmem>>, vector<32x32xf32>
    tpu.vector_store %arg8[%c0_9, %c0_10], %10 {strides = array<i32>} : memref<32x32xf32, #tpu.memory_space<vmem>>, vector<32x32xf32>,
    %c0_11 = arith.constant 0 : index
    %c0_12 = arith.constant 0 : index
    %12 = vector.load %arg5[%c0_11, %c0_12] : memref<32x32xf32, #tpu.memory_space<vmem>>, vector<32x32xf32>
    %cst_13 = arith.constant dense<0.000000e+00> : vector<32x32xf32>
    %13 = tpu.matmul %0, %12, %cst_13 {dimension_numbers = #tpu.dot_dimension_numbers<[1], [0], [0], [1], [0, 0, 1, 1], [], []>} : vector<32x32xf32>, vector<32x32xf32>, vector<32x32xf32> -> vector<32x32xf32>
    %c0_14 = arith.constant 0 : index
    %c0_15 = arith.constant 0 : index
    %14 = vector.load %arg6[%c0_14, %c0_15] : memref<1x32xf32, #tpu.memory_space<vmem>>, vector<1x32xf32>
    %15 = vector.broadcast %14 : vector<1x32xf32> to vector<32x32xf32>
    %16 = arith.addf %13, %15 : vector<32x32xf32>
    %c0_16 = arith.constant 0 : index
    %c0_17 = arith.constant 0 : index
    %17 = vector.load %arg9[%c0_16, %c0_17] : memref<32x32xf32, #tpu.memory_space<vmem>>, vector<32x32xf32>
    tpu.vector_store %arg9[%c0_16, %c0_17], %16 {strides = array<i32>} : memref<32x32xf32, #tpu.memory_space<vmem>>, vector<32x32xf32>,
    return
  }
  func.func @transform_0(%arg0: i32) -> (i32, i32) {
    %c0_i32 = arith.constant 0 : i32
    %c0_i32_0 = arith.constant 0 : i32
    return %arg0, %c0_i32 : i32, i32
  }
  func.func @transform_1(%arg0: i32) -> (i32, i32) {
    %c0_i32 = arith.constant 0 : i32
    %c0_i32_0 = arith.constant 0 : i32
    return %arg0, %c0_i32 : i32, i32
  }
  func.func @transform_2(%arg0: i32) -> (i32, i32) {
    %c0_i32 = arith.constant 0 : i32
    %c0_i32_0 = arith.constant 0 : i32
    %c0_i32_1 = arith.constant 0 : i32
    return %c0_i32, %c0_i32_0 : i32, i32
  }
  func.func @transform_3(%arg0: i32) -> (i32, i32) {
    %c0_i32 = arith.constant 0 : i32
    %c0_i32_0 = arith.constant 0 : i32
    %c0_i32_1 = arith.constant 0 : i32
    return %c0_i32, %c0_i32_0 : i32, i32
  }
  func.func @transform_4(%arg0: i32) -> (i32, i32) {
    %c0_i32 = arith.constant 0 : i32
    %c0_i32_0 = arith.constant 0 : i32
    %c0_i32_1 = arith.constant 0 : i32
    return %c0_i32, %c0_i32_0 : i32, i32
  }
  func.func @transform_5(%arg0: i32) -> (i32, i32) {
    %c0_i32 = arith.constant 0 : i32
    %c0_i32_0 = arith.constant 0 : i32
    %c0_i32_1 = arith.constant 0 : i32
    return %c0_i32, %c0_i32_0 : i32, i32
  }
  func.func @transform_6(%arg0: i32) -> (i32, i32) {
    %c0_i32 = arith.constant 0 : i32
    %c0_i32_0 = arith.constant 0 : i32
    return %arg0, %c0_i32 : i32, i32
  }
  func.func @transform_7(%arg0: i32) -> (i32, i32) {
    %c0_i32 = arith.constant 0 : i32
    %c0_i32_0 = arith.constant 0 : i32
    return %arg0, %c0_i32 : i32, i32
  }
  func.func @transform_8(%arg0: i32) -> (i32, i32) {
    %c0_i32 = arith.constant 0 : i32
    %c0_i32_0 = arith.constant 0 : i32
    return %arg0, %c0_i32 : i32, i32
  }
}

module attributes {stable_mosaic.version = 11 : i64} {
  func.func @_attn_out_ln_kernel(%arg0: i32, %arg1: memref<1x16x32xf32, #tpu.memory_space<vmem>>, %arg2: memref<1x16x32xf32, #tpu.memory_space<vmem>>, %arg3: memref<1x16x32xf32, #tpu.memory_space<vmem>>, %arg4: memref<1x16x32xf32, #tpu.memory_space<vmem>>, %arg5: memref<32x32xf32, #tpu.memory_space<vmem>>, %arg6: memref<1x32xf32, #tpu.memory_space<vmem>>, %arg7: memref<1x32xf32, #tpu.memory_space<vmem>>, %arg8: memref<1x32xf32, #tpu.memory_space<vmem>>, %arg9: memref<1x16x32xf32, #tpu.memory_space<vmem>>) attributes {dimension_semantics = [#tpu.dimension_semantics<parallel>], iteration_bounds = array<i64: 2>, scalar_prefetch = 0 : i64, scratch_operands = 0 : i64, tpu.core_type = #tpu.core_type<tc>, window_params = [{transform_indices = @transform_0, window_bounds = array<i64: 1, 16, 32>}, {transform_indices = @transform_1, window_bounds = array<i64: 1, 16, 32>}, {transform_indices = @transform_2, window_bounds = array<i64: 1, 16, 32>}, {transform_indices = @transform_3, window_bounds = array<i64: 1, 16, 32>}, {pipeline_mode = #tpu.pipeline_mode<synchronous>, transform_indices = @transform_4, window_bounds = array<i64: 32, 32>}, {pipeline_mode = #tpu.pipeline_mode<synchronous>, transform_indices = @transform_5, window_bounds = array<i64: 1, 32>}, {pipeline_mode = #tpu.pipeline_mode<synchronous>, transform_indices = @transform_6, window_bounds = array<i64: 1, 32>}, {pipeline_mode = #tpu.pipeline_mode<synchronous>, transform_indices = @transform_7, window_bounds = array<i64: 1, 32>}, {transform_indices = @transform_8, window_bounds = array<i64: 1, 16, 32>}]} {
    %c0 = arith.constant 0 : index
    %c0_0 = arith.constant 0 : index
    %c0_1 = arith.constant 0 : index
    %0 = vector.load %arg1[%c0, %c0_0, %c0_1] : memref<1x16x32xf32, #tpu.memory_space<vmem>>, vector<1x16x32xf32>
    %1 = vector.shape_cast %0 : vector<1x16x32xf32> to vector<16x32xf32>
    %cst = arith.constant 0.353553385 : f32
    %2 = vector.broadcast %cst : f32 to vector<16x32xf32>
    %3 = arith.mulf %1, %2 : vector<16x32xf32>
    %c0_2 = arith.constant 0 : index
    %c0_3 = arith.constant 0 : index
    %c0_4 = arith.constant 0 : index
    %4 = vector.load %arg2[%c0_2, %c0_3, %c0_4] : memref<1x16x32xf32, #tpu.memory_space<vmem>>, vector<1x16x32xf32>
    %5 = vector.shape_cast %4 : vector<1x16x32xf32> to vector<16x32xf32>
    %c0_5 = arith.constant 0 : index
    %c0_6 = arith.constant 0 : index
    %c0_7 = arith.constant 0 : index
    %6 = vector.load %arg3[%c0_5, %c0_6, %c0_7] : memref<1x16x32xf32, #tpu.memory_space<vmem>>, vector<1x16x32xf32>
    %7 = vector.shape_cast %6 : vector<1x16x32xf32> to vector<16x32xf32>
    %8 = vector.extract_strided_slice %3 {offsets = [0, 0], sizes = [16, 8], strides = [1, 1]} : vector<16x32xf32> to vector<16x8xf32>
    %9 = vector.extract_strided_slice %5 {offsets = [0, 0], sizes = [16, 8], strides = [1, 1]} : vector<16x32xf32> to vector<16x8xf32>
    %10 = vector.extract_strided_slice %7 {offsets = [0, 0], sizes = [16, 8], strides = [1, 1]} : vector<16x32xf32> to vector<16x8xf32>
    %cst_8 = arith.constant dense<0.000000e+00> : vector<16x16xf32>
    %11 = tpu.matmul %8, %9, %cst_8 {dimension_numbers = #tpu.dot_dimension_numbers<[1], [1], [0], [0], [0, 0, 1, 0], [], []>} : vector<16x8xf32>, vector<16x8xf32>, vector<16x16xf32> -> vector<16x16xf32>
    %cst_9 = arith.constant dense<0xFF800000> : vector<16xf32>
    %12 = vector.multi_reduction <maximumf>, %11, %cst_9 [1] : vector<16x16xf32> to vector<16xf32>
    %13 = vector.shape_cast %12 : vector<16xf32> to vector<16x1xf32>
    %14 = vector.broadcast %13 : vector<16x1xf32> to vector<16x16xf32>
    %15 = arith.subf %11, %14 : vector<16x16xf32>
    %16 = math.exp %15 : vector<16x16xf32>
    %cst_10 = arith.constant dense<0.000000e+00> : vector<16xf32>
    %17 = vector.multi_reduction <add>, %16, %cst_10 [1] : vector<16x16xf32> to vector<16xf32>
    %18 = vector.shape_cast %17 : vector<16xf32> to vector<16x1xf32>
    %19 = tpu.reciprocal %18 {approx = true} : vector<16x1xf32> -> vector<16x1xf32>
    %20 = vector.broadcast %19 : vector<16x1xf32> to vector<16x16xf32>
    %21 = arith.mulf %16, %20 : vector<16x16xf32>
    %cst_11 = arith.constant dense<0.000000e+00> : vector<16x8xf32>
    %22 = tpu.matmul %21, %10, %cst_11 {dimension_numbers = #tpu.dot_dimension_numbers<[1], [0], [0], [1], [0, 0, 1, 1], [], []>} : vector<16x16xf32>, vector<16x8xf32>, vector<16x8xf32> -> vector<16x8xf32>
    %23 = vector.extract_strided_slice %3 {offsets = [0, 8], sizes = [16, 8], strides = [1, 1]} : vector<16x32xf32> to vector<16x8xf32>
    %24 = vector.extract_strided_slice %5 {offsets = [0, 8], sizes = [16, 8], strides = [1, 1]} : vector<16x32xf32> to vector<16x8xf32>
    %25 = vector.extract_strided_slice %7 {offsets = [0, 8], sizes = [16, 8], strides = [1, 1]} : vector<16x32xf32> to vector<16x8xf32>
    %cst_12 = arith.constant dense<0.000000e+00> : vector<16x16xf32>
    %26 = tpu.matmul %23, %24, %cst_12 {dimension_numbers = #tpu.dot_dimension_numbers<[1], [1], [0], [0], [0, 0, 1, 0], [], []>} : vector<16x8xf32>, vector<16x8xf32>, vector<16x16xf32> -> vector<16x16xf32>
    %cst_13 = arith.constant dense<0xFF800000> : vector<16xf32>
    %27 = vector.multi_reduction <maximumf>, %26, %cst_13 [1] : vector<16x16xf32> to vector<16xf32>
    %28 = vector.shape_cast %27 : vector<16xf32> to vector<16x1xf32>
    %29 = vector.broadcast %28 : vector<16x1xf32> to vector<16x16xf32>
    %30 = arith.subf %26, %29 : vector<16x16xf32>
    %31 = math.exp %30 : vector<16x16xf32>
    %cst_14 = arith.constant dense<0.000000e+00> : vector<16xf32>
    %32 = vector.multi_reduction <add>, %31, %cst_14 [1] : vector<16x16xf32> to vector<16xf32>
    %33 = vector.shape_cast %32 : vector<16xf32> to vector<16x1xf32>
    %34 = tpu.reciprocal %33 {approx = true} : vector<16x1xf32> -> vector<16x1xf32>
    %35 = vector.broadcast %34 : vector<16x1xf32> to vector<16x16xf32>
    %36 = arith.mulf %31, %35 : vector<16x16xf32>
    %cst_15 = arith.constant dense<0.000000e+00> : vector<16x8xf32>
    %37 = tpu.matmul %36, %25, %cst_15 {dimension_numbers = #tpu.dot_dimension_numbers<[1], [0], [0], [1], [0, 0, 1, 1], [], []>} : vector<16x16xf32>, vector<16x8xf32>, vector<16x8xf32> -> vector<16x8xf32>
    %38 = vector.extract_strided_slice %3 {offsets = [0, 16], sizes = [16, 8], strides = [1, 1]} : vector<16x32xf32> to vector<16x8xf32>
    %39 = vector.extract_strided_slice %5 {offsets = [0, 16], sizes = [16, 8], strides = [1, 1]} : vector<16x32xf32> to vector<16x8xf32>
    %40 = vector.extract_strided_slice %7 {offsets = [0, 16], sizes = [16, 8], strides = [1, 1]} : vector<16x32xf32> to vector<16x8xf32>
    %cst_16 = arith.constant dense<0.000000e+00> : vector<16x16xf32>
    %41 = tpu.matmul %38, %39, %cst_16 {dimension_numbers = #tpu.dot_dimension_numbers<[1], [1], [0], [0], [0, 0, 1, 0], [], []>} : vector<16x8xf32>, vector<16x8xf32>, vector<16x16xf32> -> vector<16x16xf32>
    %cst_17 = arith.constant dense<0xFF800000> : vector<16xf32>
    %42 = vector.multi_reduction <maximumf>, %41, %cst_17 [1] : vector<16x16xf32> to vector<16xf32>
    %43 = vector.shape_cast %42 : vector<16xf32> to vector<16x1xf32>
    %44 = vector.broadcast %43 : vector<16x1xf32> to vector<16x16xf32>
    %45 = arith.subf %41, %44 : vector<16x16xf32>
    %46 = math.exp %45 : vector<16x16xf32>
    %cst_18 = arith.constant dense<0.000000e+00> : vector<16xf32>
    %47 = vector.multi_reduction <add>, %46, %cst_18 [1] : vector<16x16xf32> to vector<16xf32>
    %48 = vector.shape_cast %47 : vector<16xf32> to vector<16x1xf32>
    %49 = tpu.reciprocal %48 {approx = true} : vector<16x1xf32> -> vector<16x1xf32>
    %50 = vector.broadcast %49 : vector<16x1xf32> to vector<16x16xf32>
    %51 = arith.mulf %46, %50 : vector<16x16xf32>
    %cst_19 = arith.constant dense<0.000000e+00> : vector<16x8xf32>
    %52 = tpu.matmul %51, %40, %cst_19 {dimension_numbers = #tpu.dot_dimension_numbers<[1], [0], [0], [1], [0, 0, 1, 1], [], []>} : vector<16x16xf32>, vector<16x8xf32>, vector<16x8xf32> -> vector<16x8xf32>
    %53 = vector.extract_strided_slice %3 {offsets = [0, 24], sizes = [16, 8], strides = [1, 1]} : vector<16x32xf32> to vector<16x8xf32>
    %54 = vector.extract_strided_slice %5 {offsets = [0, 24], sizes = [16, 8], strides = [1, 1]} : vector<16x32xf32> to vector<16x8xf32>
    %55 = vector.extract_strided_slice %7 {offsets = [0, 24], sizes = [16, 8], strides = [1, 1]} : vector<16x32xf32> to vector<16x8xf32>
    %cst_20 = arith.constant dense<0.000000e+00> : vector<16x16xf32>
    %56 = tpu.matmul %53, %54, %cst_20 {dimension_numbers = #tpu.dot_dimension_numbers<[1], [1], [0], [0], [0, 0, 1, 0], [], []>} : vector<16x8xf32>, vector<16x8xf32>, vector<16x16xf32> -> vector<16x16xf32>
    %cst_21 = arith.constant dense<0xFF800000> : vector<16xf32>
    %57 = vector.multi_reduction <maximumf>, %56, %cst_21 [1] : vector<16x16xf32> to vector<16xf32>
    %58 = vector.shape_cast %57 : vector<16xf32> to vector<16x1xf32>
    %59 = vector.broadcast %58 : vector<16x1xf32> to vector<16x16xf32>
    %60 = arith.subf %56, %59 : vector<16x16xf32>
    %61 = math.exp %60 : vector<16x16xf32>
    %cst_22 = arith.constant dense<0.000000e+00> : vector<16xf32>
    %62 = vector.multi_reduction <add>, %61, %cst_22 [1] : vector<16x16xf32> to vector<16xf32>
    %63 = vector.shape_cast %62 : vector<16xf32> to vector<16x1xf32>
    %64 = tpu.reciprocal %63 {approx = true} : vector<16x1xf32> -> vector<16x1xf32>
    %65 = vector.broadcast %64 : vector<16x1xf32> to vector<16x16xf32>
    %66 = arith.mulf %61, %65 : vector<16x16xf32>
    %cst_23 = arith.constant dense<0.000000e+00> : vector<16x8xf32>
    %67 = tpu.matmul %66, %55, %cst_23 {dimension_numbers = #tpu.dot_dimension_numbers<[1], [0], [0], [1], [0, 0, 1, 1], [], []>} : vector<16x16xf32>, vector<16x8xf32>, vector<16x8xf32> -> vector<16x8xf32>
    %68 = tpu.concatenate %22, %37, %52, %67 in 1 : vector<16x8xf32>, vector<16x8xf32>, vector<16x8xf32>, vector<16x8xf32> -> vector<16x32xf32>
    %c0_24 = arith.constant 0 : index
    %c0_25 = arith.constant 0 : index
    %69 = vector.load %arg5[%c0_24, %c0_25] : memref<32x32xf32, #tpu.memory_space<vmem>>, vector<32x32xf32>
    %cst_26 = arith.constant dense<0.000000e+00> : vector<16x32xf32>
    %70 = tpu.matmul %68, %69, %cst_26 {dimension_numbers = #tpu.dot_dimension_numbers<[1], [0], [0], [1], [0, 0, 1, 1], [], []>} : vector<16x32xf32>, vector<32x32xf32>, vector<16x32xf32> -> vector<16x32xf32>
    %c0_27 = arith.constant 0 : index
    %c0_28 = arith.constant 0 : index
    %71 = vector.load %arg6[%c0_27, %c0_28] : memref<1x32xf32, #tpu.memory_space<vmem>>, vector<1x32xf32>
    %72 = vector.broadcast %71 : vector<1x32xf32> to vector<16x32xf32>
    %73 = arith.addf %70, %72 : vector<16x32xf32>
    %c0_29 = arith.constant 0 : index
    %c0_30 = arith.constant 0 : index
    %c0_31 = arith.constant 0 : index
    %74 = vector.load %arg4[%c0_29, %c0_30, %c0_31] : memref<1x16x32xf32, #tpu.memory_space<vmem>>, vector<1x16x32xf32>
    %75 = vector.shape_cast %74 : vector<1x16x32xf32> to vector<16x32xf32>
    %76 = arith.addf %75, %73 : vector<16x32xf32>
    %cst_32 = arith.constant dense<0.000000e+00> : vector<16xf32>
    %77 = vector.multi_reduction <add>, %76, %cst_32 [1] : vector<16x32xf32> to vector<16xf32>
    %78 = vector.shape_cast %77 : vector<16xf32> to vector<16x1xf32>
    %cst_33 = arith.constant 3.200000e+01 : f32
    %79 = vector.broadcast %cst_33 : f32 to vector<16x1xf32>
    %80 = arith.divf %78, %79 : vector<16x1xf32>
    %81 = vector.broadcast %80 : vector<16x1xf32> to vector<16x32xf32>
    %82 = arith.subf %76, %81 : vector<16x32xf32>
    %83 = arith.mulf %82, %82 : vector<16x32xf32>
    %cst_34 = arith.constant dense<0.000000e+00> : vector<16xf32>
    %84 = vector.multi_reduction <add>, %83, %cst_34 [1] : vector<16x32xf32> to vector<16xf32>
    %85 = vector.shape_cast %84 : vector<16xf32> to vector<16x1xf32>
    %cst_35 = arith.constant 3.200000e+01 : f32
    %86 = vector.broadcast %cst_35 : f32 to vector<16x1xf32>
    %87 = arith.divf %85, %86 : vector<16x1xf32>
    %88 = vector.broadcast %80 : vector<16x1xf32> to vector<16x32xf32>
    %89 = arith.subf %76, %88 : vector<16x32xf32>
    %cst_36 = arith.constant 9.99999974E-6 : f32
    %90 = vector.broadcast %cst_36 : f32 to vector<16x1xf32>
    %91 = arith.addf %87, %90 : vector<16x1xf32>
    %92 = math.rsqrt %91 : vector<16x1xf32>
    %93 = vector.broadcast %92 : vector<16x1xf32> to vector<16x32xf32>
    %94 = arith.mulf %89, %93 : vector<16x32xf32>
    %c0_37 = arith.constant 0 : index
    %c0_38 = arith.constant 0 : index
    %95 = vector.load %arg7[%c0_37, %c0_38] : memref<1x32xf32, #tpu.memory_space<vmem>>, vector<1x32xf32>
    %96 = vector.broadcast %95 : vector<1x32xf32> to vector<16x32xf32>
    %97 = arith.mulf %94, %96 : vector<16x32xf32>
    %c0_39 = arith.constant 0 : index
    %c0_40 = arith.constant 0 : index
    %98 = vector.load %arg8[%c0_39, %c0_40] : memref<1x32xf32, #tpu.memory_space<vmem>>, vector<1x32xf32>
    %99 = vector.broadcast %98 : vector<1x32xf32> to vector<16x32xf32>
    %100 = arith.addf %97, %99 : vector<16x32xf32>
    %c0_41 = arith.constant 0 : index
    %c0_42 = arith.constant 0 : index
    %c0_43 = arith.constant 0 : index
    %101 = vector.load %arg9[%c0_41, %c0_42, %c0_43] : memref<1x16x32xf32, #tpu.memory_space<vmem>>, vector<1x16x32xf32>
    %102 = vector.shape_cast %101 : vector<1x16x32xf32> to vector<16x32xf32>
    %103 = vector.shape_cast %100 : vector<16x32xf32> to vector<1x16x32xf32>
    tpu.vector_store %arg9[%c0_41, %c0_42, %c0_43], %103 {strides = array<i32>} : memref<1x16x32xf32, #tpu.memory_space<vmem>>, vector<1x16x32xf32>,
    return
  }
  func.func @transform_0(%arg0: i32) -> (i32, i32, i32) {
    %c0_i32 = arith.constant 0 : i32
    %c0_i32_0 = arith.constant 0 : i32
    %c0_i32_1 = arith.constant 0 : i32
    return %arg0, %c0_i32, %c0_i32_0 : i32, i32, i32
  }
  func.func @transform_1(%arg0: i32) -> (i32, i32, i32) {
    %c0_i32 = arith.constant 0 : i32
    %c0_i32_0 = arith.constant 0 : i32
    %c0_i32_1 = arith.constant 0 : i32
    return %arg0, %c0_i32, %c0_i32_0 : i32, i32, i32
  }
  func.func @transform_2(%arg0: i32) -> (i32, i32, i32) {
    %c0_i32 = arith.constant 0 : i32
    %c0_i32_0 = arith.constant 0 : i32
    %c0_i32_1 = arith.constant 0 : i32
    return %arg0, %c0_i32, %c0_i32_0 : i32, i32, i32
  }
  func.func @transform_3(%arg0: i32) -> (i32, i32, i32) {
    %c0_i32 = arith.constant 0 : i32
    %c0_i32_0 = arith.constant 0 : i32
    %c0_i32_1 = arith.constant 0 : i32
    return %arg0, %c0_i32, %c0_i32_0 : i32, i32, i32
  }
  func.func @transform_4(%arg0: i32) -> (i32, i32) {
    %c0_i32 = arith.constant 0 : i32
    %c0_i32_0 = arith.constant 0 : i32
    %c0_i32_1 = arith.constant 0 : i32
    return %c0_i32, %c0_i32_0 : i32, i32
  }
  func.func @transform_5(%arg0: i32) -> (i32, i32) {
    %c0_i32 = arith.constant 0 : i32
    %c0_i32_0 = arith.constant 0 : i32
    %c0_i32_1 = arith.constant 0 : i32
    return %c0_i32, %c0_i32_0 : i32, i32
  }
  func.func @transform_6(%arg0: i32) -> (i32, i32) {
    %c0_i32 = arith.constant 0 : i32
    %c0_i32_0 = arith.constant 0 : i32
    %c0_i32_1 = arith.constant 0 : i32
    return %c0_i32, %c0_i32_0 : i32, i32
  }
  func.func @transform_7(%arg0: i32) -> (i32, i32) {
    %c0_i32 = arith.constant 0 : i32
    %c0_i32_0 = arith.constant 0 : i32
    %c0_i32_1 = arith.constant 0 : i32
    return %c0_i32, %c0_i32_0 : i32, i32
  }
  func.func @transform_8(%arg0: i32) -> (i32, i32, i32) {
    %c0_i32 = arith.constant 0 : i32
    %c0_i32_0 = arith.constant 0 : i32
    %c0_i32_1 = arith.constant 0 : i32
    return %arg0, %c0_i32, %c0_i32_0 : i32, i32, i32
  }
}

module attributes {stable_mosaic.version = 11 : i64} {
  func.func @_ffn_ln_kernel(%arg0: i32, %arg1: memref<32x32xf32, #tpu.memory_space<vmem>>, %arg2: memref<32x64xf32, #tpu.memory_space<vmem>>, %arg3: memref<1x64xf32, #tpu.memory_space<vmem>>, %arg4: memref<64x32xf32, #tpu.memory_space<vmem>>, %arg5: memref<1x32xf32, #tpu.memory_space<vmem>>, %arg6: memref<1x32xf32, #tpu.memory_space<vmem>>, %arg7: memref<1x32xf32, #tpu.memory_space<vmem>>, %arg8: memref<32x32xf32, #tpu.memory_space<vmem>>) attributes {dimension_semantics = [#tpu.dimension_semantics<parallel>], iteration_bounds = array<i64: 1>, scalar_prefetch = 0 : i64, scratch_operands = 0 : i64, tpu.core_type = #tpu.core_type<tc>, window_params = [{transform_indices = @transform_0, window_bounds = array<i64: 32, 32>}, {pipeline_mode = #tpu.pipeline_mode<synchronous>, transform_indices = @transform_1, window_bounds = array<i64: 32, 64>}, {pipeline_mode = #tpu.pipeline_mode<synchronous>, transform_indices = @transform_2, window_bounds = array<i64: 1, 64>}, {pipeline_mode = #tpu.pipeline_mode<synchronous>, transform_indices = @transform_3, window_bounds = array<i64: 64, 32>}, {pipeline_mode = #tpu.pipeline_mode<synchronous>, transform_indices = @transform_4, window_bounds = array<i64: 1, 32>}, {pipeline_mode = #tpu.pipeline_mode<synchronous>, transform_indices = @transform_5, window_bounds = array<i64: 1, 32>}, {pipeline_mode = #tpu.pipeline_mode<synchronous>, transform_indices = @transform_6, window_bounds = array<i64: 1, 32>}, {transform_indices = @transform_7, window_bounds = array<i64: 32, 32>}]} {
    %c0 = arith.constant 0 : index
    %c0_0 = arith.constant 0 : index
    %0 = vector.load %arg1[%c0, %c0_0] : memref<32x32xf32, #tpu.memory_space<vmem>>, vector<32x32xf32>
    %c0_1 = arith.constant 0 : index
    %c0_2 = arith.constant 0 : index
    %1 = vector.load %arg2[%c0_1, %c0_2] : memref<32x64xf32, #tpu.memory_space<vmem>>, vector<32x64xf32>
    %cst = arith.constant dense<0.000000e+00> : vector<32x64xf32>
    %2 = tpu.matmul %0, %1, %cst {dimension_numbers = #tpu.dot_dimension_numbers<[1], [0], [0], [1], [0, 0, 1, 1], [], []>} : vector<32x32xf32>, vector<32x64xf32>, vector<32x64xf32> -> vector<32x64xf32>
    %c0_3 = arith.constant 0 : index
    %c0_4 = arith.constant 0 : index
    %3 = vector.load %arg3[%c0_3, %c0_4] : memref<1x64xf32, #tpu.memory_space<vmem>>, vector<1x64xf32>
    %4 = vector.broadcast %3 : vector<1x64xf32> to vector<32x64xf32>
    %5 = arith.addf %2, %4 : vector<32x64xf32>
    %cst_5 = arith.constant 0.000000e+00 : f32
    %6 = vector.broadcast %cst_5 : f32 to vector<32x64xf32>
    %7 = arith.maximumf %5, %6 : vector<32x64xf32>
    %c0_6 = arith.constant 0 : index
    %c0_7 = arith.constant 0 : index
    %8 = vector.load %arg4[%c0_6, %c0_7] : memref<64x32xf32, #tpu.memory_space<vmem>>, vector<64x32xf32>
    %cst_8 = arith.constant dense<0.000000e+00> : vector<32x32xf32>
    %9 = tpu.matmul %7, %8, %cst_8 {dimension_numbers = #tpu.dot_dimension_numbers<[1], [0], [0], [1], [0, 0, 1, 1], [], []>} : vector<32x64xf32>, vector<64x32xf32>, vector<32x32xf32> -> vector<32x32xf32>
    %c0_9 = arith.constant 0 : index
    %c0_10 = arith.constant 0 : index
    %10 = vector.load %arg5[%c0_9, %c0_10] : memref<1x32xf32, #tpu.memory_space<vmem>>, vector<1x32xf32>
    %11 = vector.broadcast %10 : vector<1x32xf32> to vector<32x32xf32>
    %12 = arith.addf %9, %11 : vector<32x32xf32>
    %13 = arith.addf %0, %12 : vector<32x32xf32>
    %cst_11 = arith.constant dense<0.000000e+00> : vector<32xf32>
    %14 = vector.multi_reduction <add>, %13, %cst_11 [1] : vector<32x32xf32> to vector<32xf32>
    %15 = vector.shape_cast %14 : vector<32xf32> to vector<32x1xf32>
    %cst_12 = arith.constant 3.200000e+01 : f32
    %16 = vector.broadcast %cst_12 : f32 to vector<32x1xf32>
    %17 = arith.divf %15, %16 : vector<32x1xf32>
    %18 = vector.broadcast %17 : vector<32x1xf32> to vector<32x32xf32>
    %19 = arith.subf %13, %18 : vector<32x32xf32>
    %20 = arith.mulf %19, %19 : vector<32x32xf32>
    %cst_13 = arith.constant dense<0.000000e+00> : vector<32xf32>
    %21 = vector.multi_reduction <add>, %20, %cst_13 [1] : vector<32x32xf32> to vector<32xf32>
    %22 = vector.shape_cast %21 : vector<32xf32> to vector<32x1xf32>
    %cst_14 = arith.constant 3.200000e+01 : f32
    %23 = vector.broadcast %cst_14 : f32 to vector<32x1xf32>
    %24 = arith.divf %22, %23 : vector<32x1xf32>
    %25 = vector.broadcast %17 : vector<32x1xf32> to vector<32x32xf32>
    %26 = arith.subf %13, %25 : vector<32x32xf32>
    %cst_15 = arith.constant 9.99999974E-6 : f32
    %27 = vector.broadcast %cst_15 : f32 to vector<32x1xf32>
    %28 = arith.addf %24, %27 : vector<32x1xf32>
    %29 = math.rsqrt %28 : vector<32x1xf32>
    %30 = vector.broadcast %29 : vector<32x1xf32> to vector<32x32xf32>
    %31 = arith.mulf %26, %30 : vector<32x32xf32>
    %c0_16 = arith.constant 0 : index
    %c0_17 = arith.constant 0 : index
    %32 = vector.load %arg6[%c0_16, %c0_17] : memref<1x32xf32, #tpu.memory_space<vmem>>, vector<1x32xf32>
    %33 = vector.broadcast %32 : vector<1x32xf32> to vector<32x32xf32>
    %34 = arith.mulf %31, %33 : vector<32x32xf32>
    %c0_18 = arith.constant 0 : index
    %c0_19 = arith.constant 0 : index
    %35 = vector.load %arg7[%c0_18, %c0_19] : memref<1x32xf32, #tpu.memory_space<vmem>>, vector<1x32xf32>
    %36 = vector.broadcast %35 : vector<1x32xf32> to vector<32x32xf32>
    %37 = arith.addf %34, %36 : vector<32x32xf32>
    %c0_20 = arith.constant 0 : index
    %c0_21 = arith.constant 0 : index
    %38 = vector.load %arg8[%c0_20, %c0_21] : memref<32x32xf32, #tpu.memory_space<vmem>>, vector<32x32xf32>
    tpu.vector_store %arg8[%c0_20, %c0_21], %37 {strides = array<i32>} : memref<32x32xf32, #tpu.memory_space<vmem>>, vector<32x32xf32>,
    return
  }
  func.func @transform_0(%arg0: i32) -> (i32, i32) {
    %c0_i32 = arith.constant 0 : i32
    %c0_i32_0 = arith.constant 0 : i32
    return %arg0, %c0_i32 : i32, i32
  }
  func.func @transform_1(%arg0: i32) -> (i32, i32) {
    %c0_i32 = arith.constant 0 : i32
    %c0_i32_0 = arith.constant 0 : i32
    %c0_i32_1 = arith.constant 0 : i32
    return %c0_i32, %c0_i32_0 : i32, i32
  }
  func.func @transform_2(%arg0: i32) -> (i32, i32) {
    %c0_i32 = arith.constant 0 : i32
    %c0_i32_0 = arith.constant 0 : i32
    %c0_i32_1 = arith.constant 0 : i32
    return %c0_i32, %c0_i32_0 : i32, i32
  }
  func.func @transform_3(%arg0: i32) -> (i32, i32) {
    %c0_i32 = arith.constant 0 : i32
    %c0_i32_0 = arith.constant 0 : i32
    %c0_i32_1 = arith.constant 0 : i32
    return %c0_i32, %c0_i32_0 : i32, i32
  }
  func.func @transform_4(%arg0: i32) -> (i32, i32) {
    %c0_i32 = arith.constant 0 : i32
    %c0_i32_0 = arith.constant 0 : i32
    %c0_i32_1 = arith.constant 0 : i32
    return %c0_i32, %c0_i32_0 : i32, i32
  }
  func.func @transform_5(%arg0: i32) -> (i32, i32) {
    %c0_i32 = arith.constant 0 : i32
    %c0_i32_0 = arith.constant 0 : i32
    %c0_i32_1 = arith.constant 0 : i32
    return %c0_i32, %c0_i32_0 : i32, i32
  }
  func.func @transform_6(%arg0: i32) -> (i32, i32) {
    %c0_i32 = arith.constant 0 : i32
    %c0_i32_0 = arith.constant 0 : i32
    %c0_i32_1 = arith.constant 0 : i32
    return %c0_i32, %c0_i32_0 : i32, i32
  }
  func.func @transform_7(%arg0: i32) -> (i32, i32) {
    %c0_i32 = arith.constant 0 : i32
    %c0_i32_0 = arith.constant 0 : i32
    return %arg0, %c0_i32 : i32, i32
  }
}

</mosaic_0001>

<llo_original>
// kernel: transformer_encoder.6
$region0: #{transformer_encoder.6}
  #allocation0 [shape = 'u32[]', space=smem, size = 0x4, offset = 0x4, fixed_abs, tag = 'smem constant byte address 0x4 - core index']
  #allocation1 [shape = 'u32[144,128]{1,0:T(1,128)}', space=vmem, size = 0x12000, scoped, tag = 'internal scratch']
  %s0 = inlined_call_operand.vmem [shape: f32[32,32], index: 0, kind: input, shape index: {}]
  %s1 = inlined_call_operand.vmem [shape: f32[32,32], index: 1, kind: input, shape index: {}]
  %s2 = inlined_call_operand.vmem [shape: f32[32,64], index: 2, kind: input, shape index: {}]
  %s3 = inlined_call_operand.vmem [shape: f32[1,64], index: 3, kind: input, shape index: {}]
  %s4 = inlined_call_operand.vmem [shape: f32[32,32], index: 4, kind: input, shape index: {}]
  %s5 = inlined_call_operand.vmem [shape: f32[1,32], index: 5, kind: input, shape index: {}]
  %s6 = inlined_call_operand.vmem [shape: f32[32,32], index: 6, kind: output, shape index: {0}]
  %s7 = inlined_call_operand.vmem [shape: f32[32,32], index: 7, kind: output, shape index: {1}]
  %s8 = inlined_call_operand.vmem [shape: f32[32,32], index: 8, kind: output, shape index: {2}]
  %9 = xla_tuple %s6, %s7, %s8
  %s10 = sld [smem:[#allocation0]]
  $region50: #{transformer_encoder.6} parent=0
    _
  %s12 = ssub.s32 1, %s10
  %s13 = scalar_select 0, %s12, %s10
  // Predicated region
  $region2: #{transformer_encoder.6} parent=0 // pred_check
    _
  $region3: #{transformer_encoder.6} parent=0 // pred_check_branch
    %15 = sbr.rel (0) target = $region5
  $region4: #{transformer_encoder.6} parent=0 // pred_region
    _
  $region5: #{transformer_encoder.6} parent=0 // pred_fallthru
    _
  // Predicated region
  $region6: #{transformer_encoder.6} parent=0 // pred_check
    _
  $region7: #{transformer_encoder.6} parent=0 // pred_check_branch
    %17 = sbr.rel (0) target = $region9
  $region8: #{transformer_encoder.6} parent=0 // pred_region
    _
  $region9: #{transformer_encoder.6} parent=0 // pred_fallthru
    _
  // Predicated region
  $region10: #{transformer_encoder.6} parent=0 // pred_check
    _
  $region11: #{transformer_encoder.6} parent=0 // pred_check_branch
    %19 = sbr.rel (0) target = $region13
  $region12: #{transformer_encoder.6} parent=0 // pred_region
    _
  $region13: #{transformer_encoder.6} parent=0 // pred_fallthru
    _
  // Predicated region
  $region14: #{transformer_encoder.6} parent=0 // pred_check
    _
  $region15: #{transformer_encoder.6} parent=0 // pred_check_branch
    %21 = sbr.rel (0) target = $region17
  $region16: #{transformer_encoder.6} parent=0 // pred_region
    _
  $region17: #{transformer_encoder.6} parent=0 // pred_fallthru
    _
  // Predicated region
  $region18: #{transformer_encoder.6} parent=0 // pred_check
    _
  $region19: #{transformer_encoder.6} parent=0 // pred_check_branch
    %23 = sbr.rel (0) target = $region21
  $region20: #{transformer_encoder.6} parent=0 // pred_region
    _
  $region21: #{transformer_encoder.6} parent=0 // pred_fallthru
    _
  // Predicated region
  $region22: #{transformer_encoder.6} parent=0 // pred_check
    _
  $region23: #{transformer_encoder.6} parent=0 // pred_check_branch
    %25 = sbr.rel (0) target = $region25
  $region24: #{transformer_encoder.6} parent=0 // pred_region
    _
  $region25: #{transformer_encoder.6} parent=0 // pred_fallthru
    _
  %v26 = vld [vmem:[%s0] sm:$0xff]
  %v27 = vld [vmem:[%s0 + $0x8] sm:$0xff]
  %v28 = vld [vmem:[%s0 + $0x10] sm:$0xff]
  %v29 = vld [vmem:[%s0 + $0x18] sm:$0xff]
  %v30 = vld [vmem:[%s1] sm:$0xff]
  %v31 = vld [vmem:[%s1 + $0x8] sm:$0xff]
  %v32 = vld [vmem:[%s1 + $0x10] sm:$0xff]
  %v33 = vld [vmem:[%s1 + $0x18] sm:$0xff]
  %v34 = vadd.f32 %v26, %v30
  %v35 = vadd.f32 %v27, %v31
  %v36 = vadd.f32 %v28, %v32
  %v37 = vadd.f32 %v29, %v33
  %v38 = vld [vmem:[%s2] sm:$0xff]
  %v39 = vld [vmem:[%s2 + $0x8] sm:$0xff]
  %v40 = vld [vmem:[%s2 + $0x10] sm:$0xff]
  %v41 = vld [vmem:[%s2 + $0x18] sm:$0xff]
  %v42 = vld [vmem:[%s3] sm:$0x1]
  %v44 = vlaneseq
  %v45 = vshrl.u32 %v44, 7
  %v46 = vsub.s32 0, %v45
  %v47 = vrot.slane %v42, %v46
  %vm49 = vcmask 261120
  %v51 = vsel %vm49, %v34, 0
  %v54 = vsel %vm49, %v35, 0
  %v57 = vsel %vm49, %v36, 0
  %v60 = vsel %vm49, %v37, 0
  %62 = vmatprep.subr.mxu0 0.0
  %63 = vmatpush1.msra.mxu0 0.0
  %64 = vmatprep.subr.mxu0 0.0
  %65 = vmatpush1.msra.mxu0 0.0
  %66 = vmatprep.subr.mxu0 0.0
  %67 = vmatpush1.msra.mxu0 0.0
  %68 = vmatprep.subr.mxu0 0.0
  %69 = vmatpush1.msra.mxu0 0.0
  %70 = vmatprep.subr.mxu0 0.0
  %71 = vmatpush1.msra.mxu0 0.0
  %72 = vmatprep.subr.mxu0 0.0
  %73 = vmatpush1.msra.mxu0 0.0
  %74 = vmatprep.subr.mxu0 0.0
  %75 = vmatpush1.msra.mxu0 0.0
  %76 = vmatprep.subr.mxu0 0.0
  %77 = vmatpush1.msra.mxu0 0.0
  %78 = vmatprep.subr.mxu0 0.0
  %79 = vmatpush1.msra.mxu0 0.0
  %80 = vmatprep.subr.mxu0 0.0
  %81 = vmatpush1.msra.mxu0 0.0
  %82 = vmatprep.subr.mxu0 0.0
  %83 = vmatpush1.msra.mxu0 0.0
  %84 = vmatprep.subr.mxu0 0.0
  %85 = vmatpush1.msra.mxu0 0.0
  %86 = vmatprep.subr.mxu0 0.0
  %87 = vmatpush1.msra.mxu0 %v41
  %88 = vmatprep.subr.mxu0 0.0
  %89 = vmatpush1.msra.mxu0 %v40
  %90 = vmatprep.subr.mxu0 0.0
  %91 = vmatpush1.msra.mxu0 %v39
  %92 = vmatprep.subr.mxu0 0.0
  %93 = vmatpush1.msra.mxu0 %v38
  %94 = vmatprep.subr.mxu0 0.0
  %95 = vmatpush2.msra.mxu0 0.0
  %96 = vmatprep.subr.mxu0 0.0
  %97 = vmatpush2.msra.mxu0 0.0
  %98 = vmatprep.subr.mxu0 0.0
  %99 = vmatpush2.msra.mxu0 0.0
  %100 = vmatprep.subr.mxu0 0.0
  %101 = vmatpush2.msra.mxu0 0.0
  %102 = vmatprep.subr.mxu0 0.0
  %103 = vmatpush2.msra.mxu0 0.0
  %104 = vmatprep.subr.mxu0 0.0
  %105 = vmatpush2.msra.mxu0 0.0
  %106 = vmatprep.subr.mxu0 0.0
  %107 = vmatpush2.msra.mxu0 0.0
  %108 = vmatprep.subr.mxu0 0.0
  %109 = vmatpush2.msra.mxu0 0.0
  %110 = vmatprep.subr.mxu0 0.0
  %111 = vmatpush2.msra.mxu0 0.0
  %112 = vmatprep.subr.mxu0 0.0
  %113 = vmatpush2.msra.mxu0 0.0
  %114 = vmatprep.subr.mxu0 0.0
  %115 = vmatpush2.msra.mxu0 0.0
  %116 = vmatprep.subr.mxu0 0.0
  %117 = vmatpush2.msra.mxu0 0.0
  %118 = vmatprep.subr.mxu0 0.0
  %119 = vmatpush2.msra.mxu0 0.0
  %120 = vmatprep.subr.mxu0 0.0
  %121 = vmatpush2.msra.mxu0 0.0
  %122 = vmatprep.subr.mxu0 0.0
  %123 = vmatpush2.msra.mxu0 0.0
  %124 = vmatprep.subr.mxu0 0.0
  %125 = vmatpush2.msra.mxu0 0.0
  %126 = vmatprep.mubr.f32.mxu0 0.0
  %127 = vmatmul.mubr.f32.gmra.mxu0 %v51
  %v128 = vpop.f32.mrf.mxu0
  %v129 = vadd.f32 %v47, %v128
  %v130 = vpop.f32.mrf.mxu0
  %131 = vmatprep.mubr.f32.mxu0 0.0
  %132 = vmatmul.mubr.f32.gmra.mxu0 %v54
  %v133 = vpop.f32.mrf.mxu0
  %v134 = vadd.f32 %v47, %v133
  %v135 = vpop.f32.mrf.mxu0
  %136 = vmatprep.mubr.f32.mxu0 0.0
  %137 = vmatmul.mubr.f32.gmra.mxu0 %v57
  %v138 = vpop.f32.mrf.mxu0
  %v139 = vadd.f32 %v47, %v138
  %v140 = vpop.f32.mrf.mxu0
  %141 = vmatprep.mubr.f32.mxu0 0.0
  %142 = vmatmul.mubr.f32.gmra.mxu0 %v60
  %v143 = vpop.f32.mrf.mxu0
  %v144 = vadd.f32 %v47, %v143
  %v145 = vpop.f32.mrf.mxu0
  %146 = vdwg.mxu0
  %147 = vst.msk [vmem:[%s6] sm:$0xff] %vm49, %v129
  %148 = vst.msk [vmem:[%s6 + $0x8] sm:$0xff] %vm49, %v134
  %149 = vst.msk [vmem:[%s6 + $0x10] sm:$0xff] %vm49, %v139
  %150 = vst.msk [vmem:[%s6 + $0x18] sm:$0xff] %vm49, %v144
  %155 = vrot.lane.b32.xlu0 %v129, 96
  %v156 = vpop.permute.xlu0 %155
  %157 = vrot.lane.b32.xlu0 %v134, 96
  %v158 = vpop.permute.xlu0 %157
  %159 = vrot.lane.b32.xlu0 %v139, 96
  %v160 = vpop.permute.xlu0 %159
  %161 = vrot.lane.b32.xlu0 %v144, 96
  %v162 = vpop.permute.xlu0 %161
  %167 = vst.msk [vmem:[%s7] sm:$0xff] %vm49, %v156
  %168 = vst.msk [vmem:[%s7 + $0x8] sm:$0xff] %vm49, %v158
  %169 = vst.msk [vmem:[%s7 + $0x10] sm:$0xff] %vm49, %v160
  %170 = vst.msk [vmem:[%s7 + $0x18] sm:$0xff] %vm49, %v162
  %v171 = vld [vmem:[%s4] sm:$0xff]
  %v172 = vld [vmem:[%s4 + $0x8] sm:$0xff]
  %v173 = vld [vmem:[%s4 + $0x10] sm:$0xff]
  %v174 = vld [vmem:[%s4 + $0x18] sm:$0xff]
  %v175 = vld [vmem:[%s5] sm:$0x1]
  %v177 = vlaneseq
  %v178 = vshrl.u32 %v177, 7
  %v179 = vsub.s32 0, %v178
  %v180 = vrot.slane %v175, %v179
  %v183 = vsel %vm49, %v26, 0
  %v186 = vsel %vm49, %v27, 0
  %v189 = vsel %vm49, %v28, 0
  %v192 = vsel %vm49, %v29, 0
  %194 = vmatprep.subr.mxu0 0.0
  %195 = vmatpush1.msra.mxu0 0.0
  %196 = vmatprep.subr.mxu0 0.0
  %197 = vmatpush1.msra.mxu0 0.0
  %198 = vmatprep.subr.mxu0 0.0
  %199 = vmatpush1.msra.mxu0 0.0
  %200 = vmatprep.subr.mxu0 0.0
  %201 = vmatpush1.msra.mxu0 0.0
  %202 = vmatprep.subr.mxu0 0.0
  %203 = vmatpush1.msra.mxu0 0.0
  %204 = vmatprep.subr.mxu0 0.0
  %205 = vmatpush1.msra.mxu0 0.0
  %206 = vmatprep.subr.mxu0 0.0
  %207 = vmatpush1.msra.mxu0 0.0
  %208 = vmatprep.subr.mxu0 0.0
  %209 = vmatpush1.msra.mxu0 0.0
  %210 = vmatprep.subr.mxu0 0.0
  %211 = vmatpush1.msra.mxu0 0.0
  %212 = vmatprep.subr.mxu0 0.0
  %213 = vmatpush1.msra.mxu0 0.0
  %214 = vmatprep.subr.mxu0 0.0
  %215 = vmatpush1.msra.mxu0 0.0
  %216 = vmatprep.subr.mxu0 0.0
  %217 = vmatpush1.msra.mxu0 0.0
  %218 = vmatprep.subr.mxu0 0.0
  %219 = vmatpush1.msra.mxu0 %v174
  %220 = vmatprep.subr.mxu0 0.0
  %221 = vmatpush1.msra.mxu0 %v173
  %222 = vmatprep.subr.mxu0 0.0
  %223 = vmatpush1.msra.mxu0 %v172
  %224 = vmatprep.subr.mxu0 0.0
  %225 = vmatpush1.msra.mxu0 %v171
  %226 = vmatprep.subr.mxu0 0.0
  %227 = vmatpush2.msra.mxu0 0.0
  %228 = vmatprep.subr.mxu0 0.0
  %229 = vmatpush2.msra.mxu0 0.0
  %230 = vmatprep.subr.mxu0 0.0
  %231 = vmatpush2.msra.mxu0 0.0
  %232 = vmatprep.subr.mxu0 0.0
  %233 = vmatpush2.msra.mxu0 0.0
  %234 = vmatprep.subr.mxu0 0.0
  %235 = vmatpush2.msra.mxu0 0.0
  %236 = vmatprep.subr.mxu0 0.0
  %237 = vmatpush2.msra.mxu0 0.0
  %238 = vmatprep.subr.mxu0 0.0
  %239 = vmatpush2.msra.mxu0 0.0
  %240 = vmatprep.subr.mxu0 0.0
  %241 = vmatpush2.msra.mxu0 0.0
  %242 = vmatprep.subr.mxu0 0.0
  %243 = vmatpush2.msra.mxu0 0.0
  %244 = vmatprep.subr.mxu0 0.0
  %245 = vmatpush2.msra.mxu0 0.0
  %246 = vmatprep.subr.mxu0 0.0
  %247 = vmatpush2.msra.mxu0 0.0
  %248 = vmatprep.subr.mxu0 0.0
  %249 = vmatpush2.msra.mxu0 0.0
  %250 = vmatprep.subr.mxu0 0.0
  %251 = vmatpush2.msra.mxu0 0.0
  %252 = vmatprep.subr.mxu0 0.0
  %253 = vmatpush2.msra.mxu0 0.0
  %254 = vmatprep.subr.mxu0 0.0
  %255 = vmatpush2.msra.mxu0 0.0
  %256 = vmatprep.subr.mxu0 0.0
  %257 = vmatpush2.msra.mxu0 0.0
  %258 = vmatprep.mubr.f32.mxu0 0.0
  %259 = vmatmul.mubr.f32.gmra.mxu0 %v183
  %v260 = vpop.f32.mrf.mxu0
  %v261 = vadd.f32 %v180, %v260
  %v262 = vpop.f32.mrf.mxu0
  %263 = vmatprep.mubr.f32.mxu0 0.0
  %264 = vmatmul.mubr.f32.gmra.mxu0 %v186
  %v265 = vpop.f32.mrf.mxu0
  %v266 = vadd.f32 %v180, %v265
  %v267 = vpop.f32.mrf.mxu0
  %268 = vmatprep.mubr.f32.mxu0 0.0
  %269 = vmatmul.mubr.f32.gmra.mxu0 %v189
  %v270 = vpop.f32.mrf.mxu0
  %v271 = vadd.f32 %v180, %v270
  %v272 = vpop.f32.mrf.mxu0
  %273 = vmatprep.mubr.f32.mxu0 0.0
  %274 = vmatmul.mubr.f32.gmra.mxu0 %v192
  %v275 = vpop.f32.mrf.mxu0
  %v276 = vadd.f32 %v180, %v275
  %v277 = vpop.f32.mrf.mxu0
  %278 = vdwg.mxu0
  %279 = vst.msk [vmem:[%s8] sm:$0xff] %vm49, %v261
  %280 = vst.msk [vmem:[%s8 + $0x8] sm:$0xff] %vm49, %v266
  %281 = vst.msk [vmem:[%s8 + $0x10] sm:$0xff] %vm49, %v271
  %282 = vst.msk [vmem:[%s8 + $0x18] sm:$0xff] %vm49, %v276
  // Predicated region
  $region26: #{transformer_encoder.6} parent=0 // pred_check
    _
  $region27: #{transformer_encoder.6} parent=0 // pred_check_branch
    %284 = sbr.rel (0) target = $region29
  $region28: #{transformer_encoder.6} parent=0 // pred_region
    _
  $region29: #{transformer_encoder.6} parent=0 // pred_fallthru
    _
  // Predicated region
  $region30: #{transformer_encoder.6} parent=0 // pred_check
    _
  $region31: #{transformer_encoder.6} parent=0 // pred_check_branch
    %286 = sbr.rel (0) target = $region33
  $region32: #{transformer_encoder.6} parent=0 // pred_region
    _
  $region33: #{transformer_encoder.6} parent=0 // pred_fallthru
    _
  // Predicated region
  $region34: #{transformer_encoder.6} parent=0 // pred_check
    _
  $region35: #{transformer_encoder.6} parent=0 // pred_check_branch
    %288 = sbr.rel (0) target = $region37
  $region36: #{transformer_encoder.6} parent=0 // pred_region
    _
  $region37: #{transformer_encoder.6} parent=0 // pred_fallthru
    _
  // Predicated region
  $region38: #{transformer_encoder.6} parent=0 // pred_check
    _
  $region39: #{transformer_encoder.6} parent=0 // pred_check_branch
    %290 = sbr.rel (0) target = $region41
  $region40: #{transformer_encoder.6} parent=0 // pred_region
    _
  $region41: #{transformer_encoder.6} parent=0 // pred_fallthru
    _
  // Predicated region
  $region42: #{transformer_encoder.6} parent=0 // pred_check
    _
  $region43: #{transformer_encoder.6} parent=0 // pred_check_branch
    %292 = sbr.rel (0) target = $region45
  $region44: #{transformer_encoder.6} parent=0 // pred_region
    _
  $region45: #{transformer_encoder.6} parent=0 // pred_fallthru
    _
  // Predicated region
  $region46: #{transformer_encoder.6} parent=0 // pred_check
    _
  $region47: #{transformer_encoder.6} parent=0 // pred_check_branch
    %294 = sbr.rel (0) target = $region49
  $region48: #{transformer_encoder.6} parent=0 // pred_region
    _
  $region49: #{transformer_encoder.6} parent=0 // pred_fallthru
    _

// kernel: transformer_encoder.8
$region0: #{transformer_encoder.8}
  #allocation0 [shape = 'u32[]', space=smem, size = 0x4, offset = 0x4, fixed_abs, tag = 'smem constant byte address 0x4 - core index']
  #allocation1 [shape = 'u32[144,128]{1,0:T(1,128)}', space=vmem, size = 0x12000, scoped, tag = 'internal scratch']
  %s0 = inlined_call_operand.vmem [shape: f32[32,32], index: 0, kind: input, shape index: {}]
  %s1 = inlined_call_operand.vmem [shape: f32[32,64], index: 1, kind: input, shape index: {}]
  %s2 = inlined_call_operand.vmem [shape: f32[1,64], index: 2, kind: input, shape index: {}]
  %s3 = inlined_call_operand.vmem [shape: f32[64,32], index: 3, kind: input, shape index: {}]
  %s4 = inlined_call_operand.vmem [shape: f32[1,32], index: 4, kind: input, shape index: {}]
  %s5 = inlined_call_operand.vmem [shape: f32[1,32], index: 5, kind: input, shape index: {}]
  %s6 = inlined_call_operand.vmem [shape: f32[1,32], index: 6, kind: input, shape index: {}]
  %s7 = inlined_call_operand.vmem [shape: f32[32,32], index: 7, kind: output, shape index: {}]
  %s8 = sld [smem:[#allocation0]]
  $region38: #{transformer_encoder.8} parent=0
    _
  %s10 = ssub.s32 1, %s8
  %s11 = scalar_select 0, %s10, %s8
  // Predicated region
  $region2: #{transformer_encoder.8} parent=0 // pred_check
    _
  $region3: #{transformer_encoder.8} parent=0 // pred_check_branch
    %13 = sbr.rel (0) target = $region5
  $region4: #{transformer_encoder.8} parent=0 // pred_region
    _
  $region5: #{transformer_encoder.8} parent=0 // pred_fallthru
    _
  // Predicated region
  $region6: #{transformer_encoder.8} parent=0 // pred_check
    _
  $region7: #{transformer_encoder.8} parent=0 // pred_check_branch
    %15 = sbr.rel (0) target = $region9
  $region8: #{transformer_encoder.8} parent=0 // pred_region
    _
  $region9: #{transformer_encoder.8} parent=0 // pred_fallthru
    _
  // Predicated region
  $region10: #{transformer_encoder.8} parent=0 // pred_check
    _
  $region11: #{transformer_encoder.8} parent=0 // pred_check_branch
    %17 = sbr.rel (0) target = $region13
  $region12: #{transformer_encoder.8} parent=0 // pred_region
    _
  $region13: #{transformer_encoder.8} parent=0 // pred_fallthru
    _
  // Predicated region
  $region14: #{transformer_encoder.8} parent=0 // pred_check
    _
  $region15: #{transformer_encoder.8} parent=0 // pred_check_branch
    %19 = sbr.rel (0) target = $region17
  $region16: #{transformer_encoder.8} parent=0 // pred_region
    _
  $region17: #{transformer_encoder.8} parent=0 // pred_fallthru
    _
  // Predicated region
  $region18: #{transformer_encoder.8} parent=0 // pred_check
    _
  $region19: #{transformer_encoder.8} parent=0 // pred_check_branch
    %21 = sbr.rel (0) target = $region21
  $region20: #{transformer_encoder.8} parent=0 // pred_region
    _
  $region21: #{transformer_encoder.8} parent=0 // pred_fallthru
    _
  // Predicated region
  $region22: #{transformer_encoder.8} parent=0 // pred_check
    _
  $region23: #{transformer_encoder.8} parent=0 // pred_check_branch
    %23 = sbr.rel (0) target = $region25
  $region24: #{transformer_encoder.8} parent=0 // pred_region
    _
  $region25: #{transformer_encoder.8} parent=0 // pred_fallthru
    _
  // Predicated region
  $region26: #{transformer_encoder.8} parent=0 // pred_check
    _
  $region27: #{transformer_encoder.8} parent=0 // pred_check_branch
    %25 = sbr.rel (0) target = $region29
  $region28: #{transformer_encoder.8} parent=0 // pred_region
    _
  $region29: #{transformer_encoder.8} parent=0 // pred_fallthru
    _
  %v26 = vld [vmem:[%s0] sm:$0xff]
  %v27 = vld [vmem:[%s0 + $0x8] sm:$0xff]
  %v28 = vld [vmem:[%s0 + $0x10] sm:$0xff]
  %v29 = vld [vmem:[%s0 + $0x18] sm:$0xff]
  %v30 = vld [vmem:[%s1] sm:$0xff]
  %v31 = vld [vmem:[%s1 + $0x8] sm:$0xff]
  %v32 = vld [vmem:[%s1 + $0x10] sm:$0xff]
  %v33 = vld [vmem:[%s1 + $0x18] sm:$0xff]
  %v34 = vld [vmem:[%s2] sm:$0x1]
  %v36 = vlaneseq
  %v37 = vshrl.u32 %v36, 7
  %v38 = vsub.s32 0, %v37
  %v39 = vrot.slane %v34, %v38
  %vm41 = vcmask 261120
  %v43 = vsel %vm41, %v26, 0
  %v46 = vsel %vm41, %v27, 0
  %v49 = vsel %vm41, %v28, 0
  %v52 = vsel %vm41, %v29, 0
  %54 = vmatprep.subr.mxu0 0.0
  %55 = vmatpush1.msra.mxu0 0.0
  %56 = vmatprep.subr.mxu0 0.0
  %57 = vmatpush1.msra.mxu0 0.0
  %58 = vmatprep.subr.mxu0 0.0
  %59 = vmatpush1.msra.mxu0 0.0
  %60 = vmatprep.subr.mxu0 0.0
  %61 = vmatpush1.msra.mxu0 0.0
  %62 = vmatprep.subr.mxu0 0.0
  %63 = vmatpush1.msra.mxu0 0.0
  %64 = vmatprep.subr.mxu0 0.0
  %65 = vmatpush1.msra.mxu0 0.0
  %66 = vmatprep.subr.mxu0 0.0
  %67 = vmatpush1.msra.mxu0 0.0
  %68 = vmatprep.subr.mxu0 0.0
  %69 = vmatpush1.msra.mxu0 0.0
  %70 = vmatprep.subr.mxu0 0.0
  %71 = vmatpush1.msra.mxu0 0.0
  %72 = vmatprep.subr.mxu0 0.0
  %73 = vmatpush1.msra.mxu0 0.0
  %74 = vmatprep.subr.mxu0 0.0
  %75 = vmatpush1.msra.mxu0 0.0
  %76 = vmatprep.subr.mxu0 0.0
  %77 = vmatpush1.msra.mxu0 0.0
  %78 = vmatprep.subr.mxu0 0.0
  %79 = vmatpush1.msra.mxu0 %v33
  %80 = vmatprep.subr.mxu0 0.0
  %81 = vmatpush1.msra.mxu0 %v32
  %82 = vmatprep.subr.mxu0 0.0
  %83 = vmatpush1.msra.mxu0 %v31
  %84 = vmatprep.subr.mxu0 0.0
  %85 = vmatpush1.msra.mxu0 %v30
  %86 = vmatprep.subr.mxu0 0.0
  %87 = vmatpush2.msra.mxu0 0.0
  %88 = vmatprep.subr.mxu0 0.0
  %89 = vmatpush2.msra.mxu0 0.0
  %90 = vmatprep.subr.mxu0 0.0
  %91 = vmatpush2.msra.mxu0 0.0
  %92 = vmatprep.subr.mxu0 0.0
  %93 = vmatpush2.msra.mxu0 0.0
  %94 = vmatprep.subr.mxu0 0.0
  %95 = vmatpush2.msra.mxu0 0.0
  %96 = vmatprep.subr.mxu0 0.0
  %97 = vmatpush2.msra.mxu0 0.0
  %98 = vmatprep.subr.mxu0 0.0
  %99 = vmatpush2.msra.mxu0 0.0
  %100 = vmatprep.subr.mxu0 0.0
  %101 = vmatpush2.msra.mxu0 0.0
  %102 = vmatprep.subr.mxu0 0.0
  %103 = vmatpush2.msra.mxu0 0.0
  %104 = vmatprep.subr.mxu0 0.0
  %105 = vmatpush2.msra.mxu0 0.0
  %106 = vmatprep.subr.mxu0 0.0
  %107 = vmatpush2.msra.mxu0 0.0
  %108 = vmatprep.subr.mxu0 0.0
  %109 = vmatpush2.msra.mxu0 0.0
  %110 = vmatprep.subr.mxu0 0.0
  %111 = vmatpush2.msra.mxu0 0.0
  %112 = vmatprep.subr.mxu0 0.0
  %113 = vmatpush2.msra.mxu0 0.0
  %114 = vmatprep.subr.mxu0 0.0
  %115 = vmatpush2.msra.mxu0 0.0
  %116 = vmatprep.subr.mxu0 0.0
  %117 = vmatpush2.msra.mxu0 0.0
  %118 = vmatprep.mubr.f32.mxu0 0.0
  %119 = vmatmul.mubr.f32.gmra.mxu0 %v43
  %v120 = vpop.f32.mrf.mxu0
  %v121 = vadd.f32 %v39, %v120
  %v122 = vpop.f32.mrf.mxu0
  %123 = vmatprep.mubr.f32.mxu0 0.0
  %124 = vmatmul.mubr.f32.gmra.mxu0 %v46
  %v125 = vpop.f32.mrf.mxu0
  %v126 = vadd.f32 %v39, %v125
  %v127 = vpop.f32.mrf.mxu0
  %128 = vmatprep.mubr.f32.mxu0 0.0
  %129 = vmatmul.mubr.f32.gmra.mxu0 %v49
  %v130 = vpop.f32.mrf.mxu0
  %v131 = vadd.f32 %v39, %v130
  %v132 = vpop.f32.mrf.mxu0
  %133 = vmatprep.mubr.f32.mxu0 0.0
  %134 = vmatmul.mubr.f32.gmra.mxu0 %v52
  %v135 = vpop.f32.mrf.mxu0
  %v136 = vadd.f32 %v39, %v135
  %v137 = vpop.f32.mrf.mxu0
  %138 = vdwg.mxu0
  %v139 = vmax.f32 %v121, 0.0
  %v140 = vmax.f32 %v126, 0.0
  %v141 = vmax.f32 %v131, 0.0
  %v142 = vmax.f32 %v136, 0.0
  %v143 = vld [vmem:[%s3] sm:$0xff]
  %v144 = vld [vmem:[%s3 + $0x8] sm:$0xff]
  %v145 = vld [vmem:[%s3 + $0x10] sm:$0xff]
  %v146 = vld [vmem:[%s3 + $0x18] sm:$0xff]
  %v147 = vld [vmem:[%s3 + $0x20] sm:$0xff]
  %v148 = vld [vmem:[%s3 + $0x28] sm:$0xff]
  %v149 = vld [vmem:[%s3 + $0x30] sm:$0xff]
  %v150 = vld [vmem:[%s3 + $0x38] sm:$0xff]
  %v151 = vld [vmem:[%s4] sm:$0x1]
  %v153 = vlaneseq
  %v154 = vshrl.u32 %v153, 7
  %v155 = vsub.s32 0, %v154
  %v156 = vrot.slane %v151, %v155
  %vm158 = vcmask 523264
  %v160 = vsel %vm158, %v139, 0
  %v163 = vsel %vm158, %v140, 0
  %v166 = vsel %vm158, %v141, 0
  %v169 = vsel %vm158, %v142, 0
  %171 = vmatprep.subr.mxu0 0.0
  %172 = vmatpush1.msra.mxu0 0.0
  %173 = vmatprep.subr.mxu0 0.0
  %174 = vmatpush1.msra.mxu0 0.0
  %175 = vmatprep.subr.mxu0 0.0
  %176 = vmatpush1.msra.mxu0 0.0
  %177 = vmatprep.subr.mxu0 0.0
  %178 = vmatpush1.msra.mxu0 0.0
  %179 = vmatprep.subr.mxu0 0.0
  %180 = vmatpush1.msra.mxu0 0.0
  %181 = vmatprep.subr.mxu0 0.0
  %182 = vmatpush1.msra.mxu0 0.0
  %183 = vmatprep.subr.mxu0 0.0
  %184 = vmatpush1.msra.mxu0 0.0
  %185 = vmatprep.subr.mxu0 0.0
  %186 = vmatpush1.msra.mxu0 0.0
  %187 = vmatprep.subr.mxu0 0.0
  %188 = vmatpush1.msra.mxu0 %v150
  %189 = vmatprep.subr.mxu0 0.0
  %190 = vmatpush1.msra.mxu0 %v149
  %191 = vmatprep.subr.mxu0 0.0
  %192 = vmatpush1.msra.mxu0 %v148
  %193 = vmatprep.subr.mxu0 0.0
  %194 = vmatpush1.msra.mxu0 %v147
  %195 = vmatprep.subr.mxu0 0.0
  %196 = vmatpush1.msra.mxu0 %v146
  %197 = vmatprep.subr.mxu0 0.0
  %198 = vmatpush1.msra.mxu0 %v145
  %199 = vmatprep.subr.mxu0 0.0
  %200 = vmatpush1.msra.mxu0 %v144
  %201 = vmatprep.subr.mxu0 0.0
  %202 = vmatpush1.msra.mxu0 %v143
  %203 = vmatprep.subr.mxu0 0.0
  %204 = vmatpush2.msra.mxu0 0.0
  %205 = vmatprep.subr.mxu0 0.0
  %206 = vmatpush2.msra.mxu0 0.0
  %207 = vmatprep.subr.mxu0 0.0
  %208 = vmatpush2.msra.mxu0 0.0
  %209 = vmatprep.subr.mxu0 0.0
  %210 = vmatpush2.msra.mxu0 0.0
  %211 = vmatprep.subr.mxu0 0.0
  %212 = vmatpush2.msra.mxu0 0.0
  %213 = vmatprep.subr.mxu0 0.0
  %214 = vmatpush2.msra.mxu0 0.0
  %215 = vmatprep.subr.mxu0 0.0
  %216 = vmatpush2.msra.mxu0 0.0
  %217 = vmatprep.subr.mxu0 0.0
  %218 = vmatpush2.msra.mxu0 0.0
  %219 = vmatprep.subr.mxu0 0.0
  %220 = vmatpush2.msra.mxu0 0.0
  %221 = vmatprep.subr.mxu0 0.0
  %222 = vmatpush2.msra.mxu0 0.0
  %223 = vmatprep.subr.mxu0 0.0
  %224 = vmatpush2.msra.mxu0 0.0
  %225 = vmatprep.subr.mxu0 0.0
  %226 = vmatpush2.msra.mxu0 0.0
  %227 = vmatprep.subr.mxu0 0.0
  %228 = vmatpush2.msra.mxu0 0.0
  %229 = vmatprep.subr.mxu0 0.0
  %230 = vmatpush2.msra.mxu0 0.0
  %231 = vmatprep.subr.mxu0 0.0
  %232 = vmatpush2.msra.mxu0 0.0
  %233 = vmatprep.subr.mxu0 0.0
  %234 = vmatpush2.msra.mxu0 0.0
  %235 = vmatprep.mubr.f32.mxu0 0.0
  %236 = vmatmul.mubr.f32.gmra.mxu0 %v160
  %v237 = vpop.f32.mrf.mxu0
  %v238 = vadd.f32 %v156, %v237
  %v239 = vpop.f32.mrf.mxu0
  %240 = vmatprep.mubr.f32.mxu0 0.0
  %241 = vmatmul.mubr.f32.gmra.mxu0 %v163
  %v242 = vpop.f32.mrf.mxu0
  %v243 = vadd.f32 %v156, %v242
  %v244 = vpop.f32.mrf.mxu0
  %245 = vmatprep.mubr.f32.mxu0 0.0
  %246 = vmatmul.mubr.f32.gmra.mxu0 %v166
  %v247 = vpop.f32.mrf.mxu0
  %v248 = vadd.f32 %v156, %v247
  %v249 = vpop.f32.mrf.mxu0
  %250 = vmatprep.mubr.f32.mxu0 0.0
  %251 = vmatmul.mubr.f32.gmra.mxu0 %v169
  %v252 = vpop.f32.mrf.mxu0
  %v253 = vadd.f32 %v156, %v252
  %v254 = vpop.f32.mrf.mxu0
  %255 = vdwg.mxu0
  %v256 = vadd.f32 %v26, %v238
  %v257 = vadd.f32 %v27, %v243
  %v258 = vadd.f32 %v28, %v248
  %v259 = vadd.f32 %v29, %v253
  %v260 = vsel %vm41, %v256, 0.0
  %261 = vadd.xlane.f32.xlu0 %v260
  %v262 = vpop.xlane.xlu0 %261
  %v263 = vsel %vm41, %v257, 0.0
  %264 = vadd.xlane.f32.xlu0 %v263
  %v265 = vpop.xlane.xlu0 %264
  %v266 = vsel %vm41, %v258, 0.0
  %267 = vadd.xlane.f32.xlu0 %v266
  %v268 = vpop.xlane.xlu0 %267
  %v269 = vsel %vm41, %v259, 0.0
  %270 = vadd.xlane.f32.xlu0 %v269
  %v271 = vpop.xlane.xlu0 %270
  %v272 = vrcp.pop 32.0
  %v273 = vmul.f32 %v262, %v272
  %v274 = vmul.f32 %v265, %v272
  %v275 = vmul.f32 %v268, %v272
  %v276 = vmul.f32 %v271, %v272
  %v277 = vsub.f32 %v256, %v273
  %v278 = vsub.f32 %v257, %v274
  %v279 = vsub.f32 %v258, %v275
  %v280 = vsub.f32 %v259, %v276
  %v281 = vmul.f32 %v277, %v277
  %v282 = vmul.f32 %v278, %v278
  %v283 = vmul.f32 %v279, %v279
  %v284 = vmul.f32 %v280, %v280
  %v285 = vsel %vm41, %v281, 0.0
  %286 = vadd.xlane.f32.xlu0 %v285
  %v287 = vpop.xlane.xlu0 %286
  %v288 = vsel %vm41, %v282, 0.0
  %289 = vadd.xlane.f32.xlu0 %v288
  %v290 = vpop.xlane.xlu0 %289
  %v291 = vsel %vm41, %v283, 0.0
  %292 = vadd.xlane.f32.xlu0 %v291
  %v293 = vpop.xlane.xlu0 %292
  %v294 = vsel %vm41, %v284, 0.0
  %295 = vadd.xlane.f32.xlu0 %v294
  %v296 = vpop.xlane.xlu0 %295
  %v297 = vmul.f32 %v287, %v272
  %v298 = vmul.f32 %v290, %v272
  %v299 = vmul.f32 %v293, %v272
  %v300 = vmul.f32 %v296, %v272
  %v301 = vadd.f32 %v297, 1e-05
  %v302 = vadd.f32 %v298, 1e-05
  %v303 = vadd.f32 %v299, 1e-05
  %v304 = vadd.f32 %v300, 1e-05
  %v305 = vrsqrt.pop %v301
  %v306 = vrsqrt.pop %v302
  %v307 = vrsqrt.pop %v303
  %v308 = vrsqrt.pop %v304
  %v309 = vmul.f32 %v277, %v305
  %v310 = vmul.f32 %v278, %v306
  %v311 = vmul.f32 %v279, %v307
  %v312 = vmul.f32 %v280, %v308
  %v313 = vld [vmem:[%s5] sm:$0x1]
  %v315 = vlaneseq
  %v316 = vshrl.u32 %v315, 7
  %v317 = vsub.s32 0, %v316
  %v318 = vrot.slane %v313, %v317
  %v320 = vmul.f32 %v309, %v318
  %v321 = vmul.f32 %v310, %v318
  %v322 = vmul.f32 %v311, %v318
  %v323 = vmul.f32 %v312, %v318
  %v324 = vld [vmem:[%s6] sm:$0x1]
  %v326 = vlaneseq
  %v327 = vshrl.u32 %v326, 7
  %v328 = vsub.s32 0, %v327
  %v329 = vrot.slane %v324, %v328
  %v331 = vadd.f32 %v320, %v329
  %v332 = vadd.f32 %v321, %v329
  %v333 = vadd.f32 %v322, %v329
  %v334 = vadd.f32 %v323, %v329
  %335 = vst.msk [vmem:[%s7] sm:$0xff] %vm41, %v331
  %336 = vst.msk [vmem:[%s7 + $0x8] sm:$0xff] %vm41, %v332
  %337 = vst.msk [vmem:[%s7 + $0x10] sm:$0xff] %vm41, %v333
  %338 = vst.msk [vmem:[%s7 + $0x18] sm:$0xff] %vm41, %v334
  // Predicated region
  $region30: #{transformer_encoder.8} parent=0 // pred_check
    _
  $region31: #{transformer_encoder.8} parent=0 // pred_check_branch
    %340 = sbr.rel (0) target = $region33
  $region32: #{transformer_encoder.8} parent=0 // pred_region
    _
  $region33: #{transformer_encoder.8} parent=0 // pred_fallthru
    _
  // Predicated region
  $region34: #{transformer_encoder.8} parent=0 // pred_check
    _
  $region35: #{transformer_encoder.8} parent=0 // pred_check_branch
    %342 = sbr.rel (0) target = $region37
  $region36: #{transformer_encoder.8} parent=0 // pred_region
    _
  $region37: #{transformer_encoder.8} parent=0 // pred_fallthru
    _

// kernel: transformer_encoder.7
$region0: #{transformer_encoder.7}
  #allocation0 [shape = 'u32[]', space=smem, size = 0x4, offset = 0x4, fixed_abs, tag = 'smem constant byte address 0x4 - core index']
  #allocation1 [shape = 'u32[144,128]{1,0:T(1,128)}', space=vmem, size = 0x12000, scoped, tag = 'internal scratch']
  %s0 = inlined_call_operand.vmem [shape: f32[2,16,32], index: 0, kind: input, shape index: {}]
  %s1 = inlined_call_operand.vmem [shape: f32[2,16,32], index: 1, kind: input, shape index: {}]
  %s2 = inlined_call_operand.vmem [shape: f32[2,16,32], index: 2, kind: input, shape index: {}]
  %s3 = inlined_call_operand.vmem [shape: f32[2,16,32], index: 3, kind: input, shape index: {}]
  %s4 = inlined_call_operand.vmem [shape: f32[32,32], index: 4, kind: input, shape index: {}]
  %s5 = inlined_call_operand.vmem [shape: f32[1,32], index: 5, kind: input, shape index: {}]
  %s6 = inlined_call_operand.vmem [shape: f32[1,32], index: 6, kind: input, shape index: {}]
  %s7 = inlined_call_operand.vmem [shape: f32[1,32], index: 7, kind: input, shape index: {}]
  %s8 = inlined_call_operand.vmem [shape: f32[2,16,32], index: 8, kind: output, shape index: {}]
  %s9 = sld [smem:[#allocation0]]
  $region65: #{transformer_encoder.7} parent=0
    _
  %s11 = ssub.s32 1, %s9
  %s12 = scalar_select 0, %s11, %s9
  loop: start=0, step=1, limit=4
  $region2: #{transformer_encoder.7} parent=0 // loop_pre_header
    _
  $region3: #{transformer_encoder.7} parent=0 // loop_header
    %s14 = sphi 0, %s18
    %p15 = scmp.ge.s32.totalorder %s14, 4
    %s24 = sphi 0, %s26
    %s27 = sphi 0, %s24
    %s28 = sphi 0, %s27
    %s44 = sphi 0, %s28
    %s50 = sphi 0, %s52
    %s53 = sphi 0, %s50
    %s54 = sphi 0, %s53
    %s70 = sphi 0, %s54
    %s76 = sphi 0, %s78
    %s79 = sphi 0, %s76
    %s80 = sphi 0, %s79
    %s96 = sphi 0, %s80
    %s102 = sphi 0, %s104
    %s105 = sphi 0, %s102
    %s106 = sphi 0, %s105
    %s122 = sphi 0, %s106
    %s126 = sphi 0, %s126
    %s128 = sphi 0, %s126
    %s129 = sphi 0, %s128
    %s143 = sphi 0, %s129
    %s147 = sphi 0, %s147
    %s149 = sphi 0, %s147
    %s150 = sphi 0, %s149
    %s164 = sphi 0, %s150
    %s168 = sphi 0, %s168
    %s170 = sphi 0, %s168
    %s171 = sphi 0, %s170
    %s185 = sphi 0, %s171
    %s189 = sphi 0, %s189
    %s191 = sphi 0, %s189
    %s192 = sphi 0, %s191
    %s206 = sphi 0, %s192
    %s212 = sphi 0, %s214
    %s215 = sphi 0, %s212
    %s216 = sphi 0, %s215
    %s232 = sphi 0, %s216
  $region4: #{transformer_encoder.7} parent=0 // loop_header_branch
    %17 = sbr.rel (%p15) target = $region8
  $region5: #{transformer_encoder.7} parent=0 // loop_body
    %s19 = ssub.s32 %s14, 1
    %s20 = ssub.s32 %s14, 2
    %s21 = sadd.s32 %s14, 1
    %s22 = ssub.s32 %s14, %s21
    %p23 = scmp.eq.s32.totalorder %s22, 0
    %s25 = sadd.s32 %s24, 1
    %s26 = scalar_select %p23, %s24, %s25
    %p29 = pneg %p23
    %p30 = scmp.eq.s32.totalorder %s14, 1
    %p31 = por %p29, %p30
    %p32 = scmp.ne.s32.totalorder %s24, %s27
    %p33 = scmp.eq.s32.totalorder %s14, 0
    %p34 = por %p32, %p33
    %p35 = scmp.ne.s32.totalorder %s24, %s27
    %p36 = scmp.eq.s32.totalorder %s19, 1
    %p37 = por %p35, %p36
    %p38 = scmp.ne.s32.totalorder %s27, %s28
    %p39 = scmp.eq.s32.totalorder %s19, 0
    %p40 = por %p38, %p39
    %p41 = scmp.ne.s32.totalorder %s27, %s28
    %p42 = scmp.eq.s32.totalorder %s20, 1
    %p43 = por %p41, %p42
    %p45 = scmp.ne.s32.totalorder %s28, %s44
    %p46 = scmp.eq.s32.totalorder %s20, 0
    %p47 = por %p45, %p46
    %s48 = ssub.s32 %s14, %s21
    %p49 = scmp.eq.s32.totalorder %s48, 0
    %s51 = sadd.s32 %s50, 1
    %s52 = scalar_select %p49, %s50, %s51
    %p55 = pneg %p49
    %p56 = scmp.eq.s32.totalorder %s14, 1
    %p57 = por %p55, %p56
    %p58 = scmp.ne.s32.totalorder %s50, %s53
    %p59 = scmp.eq.s32.totalorder %s14, 0
    %p60 = por %p58, %p59
    %p61 = scmp.ne.s32.totalorder %s50, %s53
    %p62 = scmp.eq.s32.totalorder %s19, 1
    %p63 = por %p61, %p62
    %p64 = scmp.ne.s32.totalorder %s53, %s54
    %p65 = scmp.eq.s32.totalorder %s19, 0
    %p66 = por %p64, %p65
    %p67 = scmp.ne.s32.totalorder %s53, %s54
    %p68 = scmp.eq.s32.totalorder %s20, 1
    %p69 = por %p67, %p68
    %p71 = scmp.ne.s32.totalorder %s54, %s70
    %p72 = scmp.eq.s32.totalorder %s20, 0
    %p73 = por %p71, %p72
    %s74 = ssub.s32 %s14, %s21
    %p75 = scmp.eq.s32.totalorder %s74, 0
    %s77 = sadd.s32 %s76, 1
    %s78 = scalar_select %p75, %s76, %s77
    %p81 = pneg %p75
    %p82 = scmp.eq.s32.totalorder %s14, 1
    %p83 = por %p81, %p82
    %p84 = scmp.ne.s32.totalorder %s76, %s79
    %p85 = scmp.eq.s32.totalorder %s14, 0
    %p86 = por %p84, %p85
    %p87 = scmp.ne.s32.totalorder %s76, %s79
    %p88 = scmp.eq.s32.totalorder %s19, 1
    %p89 = por %p87, %p88
    %p90 = scmp.ne.s32.totalorder %s79, %s80
    %p91 = scmp.eq.s32.totalorder %s19, 0
    %p92 = por %p90, %p91
    %p93 = scmp.ne.s32.totalorder %s79, %s80
    %p94 = scmp.eq.s32.totalorder %s20, 1
    %p95 = por %p93, %p94
    %p97 = scmp.ne.s32.totalorder %s80, %s96
    %p98 = scmp.eq.s32.totalorder %s20, 0
    %p99 = por %p97, %p98
    %s100 = ssub.s32 %s14, %s21
    %p101 = scmp.eq.s32.totalorder %s100, 0
    %s103 = sadd.s32 %s102, 1
    %s104 = scalar_select %p101, %s102, %s103
    %p107 = pneg %p101
    %p108 = scmp.eq.s32.totalorder %s14, 1
    %p109 = por %p107, %p108
    %p110 = scmp.ne.s32.totalorder %s102, %s105
    %p111 = scmp.eq.s32.totalorder %s14, 0
    %p112 = por %p110, %p111
    %p113 = scmp.ne.s32.totalorder %s102, %s105
    %p114 = scmp.eq.s32.totalorder %s19, 1
    %p115 = por %p113, %p114
    %p116 = scmp.ne.s32.totalorder %s105, %s106
    %p117 = scmp.eq.s32.totalorder %s19, 0
    %p118 = por %p116, %p117
    %p119 = scmp.ne.s32.totalorder %s105, %s106
    %p120 = scmp.eq.s32.totalorder %s20, 1
    %p121 = por %p119, %p120
    %p123 = scmp.ne.s32.totalorder %s106, %s122
    %p124 = scmp.eq.s32.totalorder %s20, 0
    %p125 = por %p123, %p124
    %s127 = sadd.s32 %s126, 1
    %p130 = scmp.eq.s32.totalorder %s14, 1
    %p131 = scmp.ne.s32.totalorder %s126, %s128
    %p132 = scmp.eq.s32.totalorder %s14, 0
    %p133 = por %p131, %p132
    %p134 = scmp.ne.s32.totalorder %s126, %s128
    %p135 = scmp.eq.s32.totalorder %s19, 1
    %p136 = por %p134, %p135
    %p137 = scmp.ne.s32.totalorder %s128, %s129
    %p138 = scmp.eq.s32.totalorder %s19, 0
    %p139 = por %p137, %p138
    %p140 = scmp.ne.s32.totalorder %s128, %s129
    %p141 = scmp.eq.s32.totalorder %s20, 1
    %p142 = por %p140, %p141
    %p144 = scmp.ne.s32.totalorder %s129, %s143
    %p145 = scmp.eq.s32.totalorder %s20, 0
    %p146 = por %p144, %p145
    %s148 = sadd.s32 %s147, 1
    %p151 = scmp.eq.s32.totalorder %s14, 1
    %p152 = scmp.ne.s32.totalorder %s147, %s149
    %p153 = scmp.eq.s32.totalorder %s14, 0
    %p154 = por %p152, %p153
    %p155 = scmp.ne.s32.totalorder %s147, %s149
    %p156 = scmp.eq.s32.totalorder %s19, 1
    %p157 = por %p155, %p156
    %p158 = scmp.ne.s32.totalorder %s149, %s150
    %p159 = scmp.eq.s32.totalorder %s19, 0
    %p160 = por %p158, %p159
    %p161 = scmp.ne.s32.totalorder %s149, %s150
    %p162 = scmp.eq.s32.totalorder %s20, 1
    %p163 = por %p161, %p162
    %p165 = scmp.ne.s32.totalorder %s150, %s164
    %p166 = scmp.eq.s32.totalorder %s20, 0
    %p167 = por %p165, %p166
    %s169 = sadd.s32 %s168, 1
    %p172 = scmp.eq.s32.totalorder %s14, 1
    %p173 = scmp.ne.s32.totalorder %s168, %s170
    %p174 = scmp.eq.s32.totalorder %s14, 0
    %p175 = por %p173, %p174
    %p176 = scmp.ne.s32.totalorder %s168, %s170
    %p177 = scmp.eq.s32.totalorder %s19, 1
    %p178 = por %p176, %p177
    %p179 = scmp.ne.s32.totalorder %s170, %s171
    %p180 = scmp.eq.s32.totalorder %s19, 0
    %p181 = por %p179, %p180
    %p182 = scmp.ne.s32.totalorder %s170, %s171
    %p183 = scmp.eq.s32.totalorder %s20, 1
    %p184 = por %p182, %p183
    %p186 = scmp.ne.s32.totalorder %s171, %s185
    %p187 = scmp.eq.s32.totalorder %s20, 0
    %p188 = por %p186, %p187
    %s190 = sadd.s32 %s189, 1
    %p193 = scmp.eq.s32.totalorder %s14, 1
    %p194 = scmp.ne.s32.totalorder %s189, %s191
    %p195 = scmp.eq.s32.totalorder %s14, 0
    %p196 = por %p194, %p195
    %p197 = scmp.ne.s32.totalorder %s189, %s191
    %p198 = scmp.eq.s32.totalorder %s19, 1
    %p199 = por %p197, %p198
    %p200 = scmp.ne.s32.totalorder %s191, %s192
    %p201 = scmp.eq.s32.totalorder %s19, 0
    %p202 = por %p200, %p201
    %p203 = scmp.ne.s32.totalorder %s191, %s192
    %p204 = scmp.eq.s32.totalorder %s20, 1
    %p205 = por %p203, %p204
    %p207 = scmp.ne.s32.totalorder %s192, %s206
    %p208 = scmp.eq.s32.totalorder %s20, 0
    %p209 = por %p207, %p208
    %s210 = ssub.s32 %s14, %s21
    %p211 = scmp.eq.s32.totalorder %s210, 0
    %s213 = sadd.s32 %s212, 1
    %s214 = scalar_select %p211, %s212, %s213
    %p217 = pneg %p211
    %p218 = scmp.eq.s32.totalorder %s14, 1
    %p219 = por %p217, %p218
    %p220 = scmp.ne.s32.totalorder %s212, %s215
    %p221 = scmp.eq.s32.totalorder %s14, 0
    %p222 = por %p220, %p221
    %p223 = scmp.ne.s32.totalorder %s212, %s215
    %p224 = scmp.eq.s32.totalorder %s19, 1
    %p225 = por %p223, %p224
    %p226 = scmp.ne.s32.totalorder %s215, %s216
    %p227 = scmp.eq.s32.totalorder %s19, 0
    %p228 = por %p226, %p227
    %p229 = scmp.ne.s32.totalorder %s215, %s216
    %p230 = scmp.eq.s32.totalorder %s20, 1
    %p231 = por %p229, %p230
    %p233 = scmp.ne.s32.totalorder %s216, %s232
    %p234 = scmp.eq.s32.totalorder %s20, 0
    %p235 = por %p233, %p234
    %p236 = scmp.le.s32.totalorder 1, %s14
    %p237 = scmp.lt.s32.totalorder %s14, 3
    %p238 = pnand %p236, %p237
    %p239 = pneg %p238
    // Predicated region
    $region9: #{transformer_encoder.7} parent=5 // pred_check
      _
    $region10: #{transformer_encoder.7} parent=5 // pred_check_branch
      %241 = sbr.rel (%p238) target = $region12
    $region11: #{transformer_encoder.7} parent=5 // pred_region
      %s242 = ssub.s32 %s14, 1
      // Predicated region
      $region13: #{transformer_encoder.7} parent=11 // pred_check
        %p243 = pneg %p139
      $region14: #{transformer_encoder.7} parent=11 // pred_check_branch
        %245 = sbr.rel (%p243) target = $region16
      $region15: #{transformer_encoder.7} parent=11 // pred_region
        _
      $region16: #{transformer_encoder.7} parent=11 // pred_fallthru
        _
      // Predicated region
      $region17: #{transformer_encoder.7} parent=11 // pred_check
        %p246 = pneg %p160
      $region18: #{transformer_encoder.7} parent=11 // pred_check_branch
        %248 = sbr.rel (%p246) target = $region20
      $region19: #{transformer_encoder.7} parent=11 // pred_region
        _
      $region20: #{transformer_encoder.7} parent=11 // pred_fallthru
        _
      // Predicated region
      $region21: #{transformer_encoder.7} parent=11 // pred_check
        %p249 = pneg %p181
      $region22: #{transformer_encoder.7} parent=11 // pred_check_branch
        %251 = sbr.rel (%p249) target = $region24
      $region23: #{transformer_encoder.7} parent=11 // pred_region
        _
      $region24: #{transformer_encoder.7} parent=11 // pred_fallthru
        _
      // Predicated region
      $region25: #{transformer_encoder.7} parent=11 // pred_check
        %p252 = pneg %p202
      $region26: #{transformer_encoder.7} parent=11 // pred_check_branch
        %254 = sbr.rel (%p252) target = $region28
      $region27: #{transformer_encoder.7} parent=11 // pred_region
        _
      $region28: #{transformer_encoder.7} parent=11 // pred_fallthru
        _
    $region12: #{transformer_encoder.7} parent=5 // pred_fallthru
      _
    %p255 = scmp.lt.s32.totalorder %s14, 2
    // Predicated region
    $region29: #{transformer_encoder.7} parent=5 // pred_check
      %p256 = pneg %p255
    $region30: #{transformer_encoder.7} parent=5 // pred_check_branch
      %258 = sbr.rel (%p256) target = $region32
    $region31: #{transformer_encoder.7} parent=5 // pred_region
      // Predicated region
      $region33: #{transformer_encoder.7} parent=31 // pred_check
        %p259 = pneg %p34
      $region34: #{transformer_encoder.7} parent=31 // pred_check_branch
        %261 = sbr.rel (%p259) target = $region36
      $region35: #{transformer_encoder.7} parent=31 // pred_region
        %p262 = scmp.lt.s32.totalorder %s14, 1
        %s263 = scalar_select %p262, %s14, 1
        %s264 = smul.addr %s263, 2
        %s265 = smul.addr %s264, 8
        %s266 = scalar_lea.vmem %s0, %s265
      $region36: #{transformer_encoder.7} parent=31 // pred_fallthru
        _
      // Predicated region
      $region37: #{transformer_encoder.7} parent=31 // pred_check
        %p267 = pneg %p60
      $region38: #{transformer_encoder.7} parent=31 // pred_check_branch
        %269 = sbr.rel (%p267) target = $region40
      $region39: #{transformer_encoder.7} parent=31 // pred_region
        %p270 = scmp.lt.s32.totalorder %s14, 1
        %s271 = scalar_select %p270, %s14, 1
        %s272 = smul.addr %s271, 2
        %s273 = smul.addr %s272, 8
        %s274 = scalar_lea.vmem %s1, %s273
      $region40: #{transformer_encoder.7} parent=31 // pred_fallthru
        _
      // Predicated region
      $region41: #{transformer_encoder.7} parent=31 // pred_check
        %p275 = pneg %p86
      $region42: #{transformer_encoder.7} parent=31 // pred_check_branch
        %277 = sbr.rel (%p275) target = $region44
      $region43: #{transformer_encoder.7} parent=31 // pred_region
        %p278 = scmp.lt.s32.totalorder %s14, 1
        %s279 = scalar_select %p278, %s14, 1
        %s280 = smul.addr %s279, 2
        %s281 = smul.addr %s280, 8
        %s282 = scalar_lea.vmem %s2, %s281
      $region44: #{transformer_encoder.7} parent=31 // pred_fallthru
        _
      // Predicated region
      $region45: #{transformer_encoder.7} parent=31 // pred_check
        %p283 = pneg %p112
      $region46: #{transformer_encoder.7} parent=31 // pred_check_branch
        %285 = sbr.rel (%p283) target = $region48
      $region47: #{transformer_encoder.7} parent=31 // pred_region
        %p286 = scmp.lt.s32.totalorder %s14, 1
        %s287 = scalar_select %p286, %s14, 1
        %s288 = smul.addr %s287, 2
        %s289 = smul.addr %s288, 8
        %s290 = scalar_lea.vmem %s3, %s289
      $region48: #{transformer_encoder.7} parent=31 // pred_fallthru
        _
    $region32: #{transformer_encoder.7} parent=5 // pred_fallthru
      _
    %p291 = scmp.le.s32.totalorder 1, %s14
    %p292 = scmp.lt.s32.totalorder %s14, 3
    %p293 = pnand %p291, %p292
    %p294 = pneg %p293
    // Predicated region
    $region49: #{transformer_encoder.7} parent=5 // pred_check
      _
    $region50: #{transformer_encoder.7} parent=5 // pred_check_branch
      %296 = sbr.rel (%p293) target = $region52
    $region51: #{transformer_encoder.7} parent=5 // pred_region
      %s297 = ssub.s32 %s14, 1
      %p298 = scmp.lt.s32.totalorder %s19, 1
      %s299 = scalar_select %p298, %s19, 1
      %s300 = smul.addr %s299, 2
      %s301 = smul.addr %s300, 8
      %s302 = scalar_lea.vmem %s0, %s301
      %p303 = pneg %p40
      %p304 = pneg %p37
      %p305 = scmp.lt.s32.totalorder %s19, 1
      %s306 = scalar_select %p305, %s19, 1
      %s307 = smul.addr %s306, 2
      %s308 = smul.addr %s307, 8
      %s309 = scalar_lea.vmem %s1, %s308
      %p310 = pneg %p66
      %p311 = pneg %p63
      %p312 = scmp.lt.s32.totalorder %s19, 1
      %s313 = scalar_select %p312, %s19, 1
      %s314 = smul.addr %s313, 2
      %s315 = smul.addr %s314, 8
      %s316 = scalar_lea.vmem %s2, %s315
      %p317 = pneg %p92
      %p318 = pneg %p89
      %p319 = scmp.lt.s32.totalorder %s19, 1
      %s320 = scalar_select %p319, %s19, 1
      %s321 = smul.addr %s320, 2
      %s322 = smul.addr %s321, 8
      %s323 = scalar_lea.vmem %s3, %s322
      %p324 = pneg %p118
      %p325 = pneg %p115
      %p326 = pneg %p139
      %p327 = pneg %p136
      %p328 = pneg %p160
      %p329 = pneg %p157
      %p330 = pneg %p181
      %p331 = pneg %p178
      %p332 = pneg %p202
      %p333 = pneg %p199
      %p334 = pneg %p228
      %p335 = pneg %p225
      %p336 = scmp.lt.s32.totalorder %s19, 1
      %s337 = scalar_select %p336, %s19, 1
      %s338 = smul.addr %s337, 2
      %s339 = smul.addr %s338, 8
      %s340 = scalar_lea.vmem %s8, %s339
      %p341 = scmp.lt.s32.totalorder %s19, 1
      %s342 = scalar_select %p341, %s19, 1
      %s343 = smul.addr %s342, 2
      %s344 = smul.addr %s343, 8
      %s345 = scalar_lea.vmem %s0, %s344
      %p346 = scmp.lt.s32.totalorder %s19, 1
      %s347 = scalar_select %p346, %s19, 1
      %s348 = smul.addr %s347, 2
      %s349 = smul.addr %s348, 8
      %s350 = scalar_lea.vmem %s1, %s349
      %p351 = scmp.lt.s32.totalorder %s19, 1
      %s352 = scalar_select %p351, %s19, 1
      %s353 = smul.addr %s352, 2
      %s354 = smul.addr %s353, 8
      %s355 = scalar_lea.vmem %s2, %s354
      %p356 = scmp.lt.s32.totalorder %s19, 1
      %s357 = scalar_select %p356, %s19, 1
      %s358 = smul.addr %s357, 2
      %s359 = smul.addr %s358, 8
      %s360 = scalar_lea.vmem %s3, %s359
      %p361 = scmp.lt.s32.totalorder %s19, 1
      %s362 = scalar_select %p361, %s19, 1
      %s363 = smul.addr %s362, 2
      %s364 = smul.addr %s363, 8
      %s365 = scalar_lea.vmem %s8, %s364
      %v366 = vld [vmem:[%s345] sm:$0xff]
      %v367 = vld [vmem:[%s345 + $0x8] sm:$0xff]
      %v368 = vmul.f32 %v366, 0.35355338
      %v369 = vmul.f32 %v367, 0.35355338
      %v370 = vld [vmem:[%s350] sm:$0xff]
      %v371 = vld [vmem:[%s350 + $0x8] sm:$0xff]
      %v372 = vld [vmem:[%s355] sm:$0xff]
      %v373 = vld [vmem:[%s355 + $0x8] sm:$0xff]
      %vm374 = vcmask 64512
      %v376 = vsel %vm374, %v368, 0
      %v379 = vsel %vm374, %v369, 0
      %v382 = vsel %vm374, %v370, 0
      %v385 = vsel %vm374, %v371, 0
      %387 = vmatprep.subr.mxu0 0.0
      %388 = vmatpush1.xpose.msra.mxu0 0.0
      %389 = vmatprep.subr.mxu0 0.0
      %390 = vmatpush1.xpose.msra.mxu0 0.0
      %391 = vmatprep.subr.mxu0 0.0
      %392 = vmatpush1.xpose.msra.mxu0 0.0
      %393 = vmatprep.subr.mxu0 0.0
      %394 = vmatpush1.xpose.msra.mxu0 0.0
      %395 = vmatprep.subr.mxu0 0.0
      %396 = vmatpush1.xpose.msra.mxu0 0.0
      %397 = vmatprep.subr.mxu0 0.0
      %398 = vmatpush1.xpose.msra.mxu0 0.0
      %399 = vmatprep.subr.mxu0 0.0
      %400 = vmatpush1.xpose.msra.mxu0 0.0
      %401 = vmatprep.subr.mxu0 0.0
      %402 = vmatpush1.xpose.msra.mxu0 0.0
      %403 = vmatprep.subr.mxu0 0.0
      %404 = vmatpush1.xpose.msra.mxu0 0.0
      %405 = vmatprep.subr.mxu0 0.0
      %406 = vmatpush1.xpose.msra.mxu0 0.0
      %407 = vmatprep.subr.mxu0 0.0
      %408 = vmatpush1.xpose.msra.mxu0 0.0
      %409 = vmatprep.subr.mxu0 0.0
      %410 = vmatpush1.xpose.msra.mxu0 0.0
      %411 = vmatprep.subr.mxu0 0.0
      %412 = vmatpush1.xpose.msra.mxu0 0.0
      %413 = vmatprep.subr.mxu0 0.0
      %414 = vmatpush1.xpose.msra.mxu0 0.0
      %415 = vmatprep.subr.mxu0 0.0
      %416 = vmatpush1.xpose.msra.mxu0 %v385
      %417 = vmatprep.subr.mxu0 0.0
      %418 = vmatpush1.xpose.msra.mxu0 %v382
      %419 = vmatprep.subr.mxu0 0.0
      %420 = vmatpush2.xpose.msra.mxu0 0.0
      %421 = vmatprep.subr.mxu0 0.0
      %422 = vmatpush2.xpose.msra.mxu0 0.0
      %423 = vmatprep.subr.mxu0 0.0
      %424 = vmatpush2.xpose.msra.mxu0 0.0
      %425 = vmatprep.subr.mxu0 0.0
      %426 = vmatpush2.xpose.msra.mxu0 0.0
      %427 = vmatprep.subr.mxu0 0.0
      %428 = vmatpush2.xpose.msra.mxu0 0.0
      %429 = vmatprep.subr.mxu0 0.0
      %430 = vmatpush2.xpose.msra.mxu0 0.0
      %431 = vmatprep.subr.mxu0 0.0
      %432 = vmatpush2.xpose.msra.mxu0 0.0
      %433 = vmatprep.subr.mxu0 0.0
      %434 = vmatpush2.xpose.msra.mxu0 0.0
      %435 = vmatprep.subr.mxu0 0.0
      %436 = vmatpush2.xpose.msra.mxu0 0.0
      %437 = vmatprep.subr.mxu0 0.0
      %438 = vmatpush2.xpose.msra.mxu0 0.0
      %439 = vmatprep.subr.mxu0 0.0
      %440 = vmatpush2.xpose.msra.mxu0 0.0
      %441 = vmatprep.subr.mxu0 0.0
      %442 = vmatpush2.xpose.msra.mxu0 0.0
      %443 = vmatprep.subr.mxu0 0.0
      %444 = vmatpush2.xpose.msra.mxu0 0.0
      %445 = vmatprep.subr.mxu0 0.0
      %446 = vmatpush2.xpose.msra.mxu0 0.0
      %447 = vmatprep.subr.mxu0 0.0
      %448 = vmatpush2.xpose.msra.mxu0 0.0
      %449 = vmatprep.subr.mxu0 0.0
      %450 = vmatpush2.xpose.msra.mxu0 0.0
      %451 = vmatprep.mubr.f32.mxu0 0.0
      %452 = vmatmul.mubr.f32.gmra.mxu0 %v376
      %v453 = vpop.f32.mrf.mxu0
      %v454 = vadd.f32 0.0, %v453
      %v455 = vpop.f32.mrf.mxu0
      %456 = vmatprep.mubr.f32.mxu0 0.0
      %457 = vmatmul.mubr.f32.gmra.mxu0 %v379
      %v458 = vpop.f32.mrf.mxu0
      %v459 = vadd.f32 0.0, %v458
      %v460 = vpop.f32.mrf.mxu0
      %461 = vdwg.mxu0
      %vm462 = vcmask 130048
      %v463 = vsel %vm462, %v454, -inf
      %464 = vmax.xlane.f32.xlu0 %v463
      %v465 = vpop.xlane.xlu0 %464
      %v466 = vsel %vm462, %v459, -inf
      %467 = vmax.xlane.f32.xlu0 %v466
      %v468 = vpop.xlane.xlu0 %467
      %v469 = vsub.f32 %v454, %v465
      %v470 = vsub.f32 %v459, %v468
      %v471 = vmul.f32 %v469, 1.442695
      %v472 = vpow.pop %v471
      %v473 = vmul.f32 %v470, 1.442695
      %v474 = vpow.pop %v473
      %v475 = vsel %vm462, %v472, 0.0
      %476 = vadd.xlane.f32.xlu0 %v475
      %v477 = vpop.xlane.xlu0 %476
      %v478 = vsel %vm462, %v474, 0.0
      %479 = vadd.xlane.f32.xlu0 %v478
      %v480 = vpop.xlane.xlu0 %479
      %v481 = vrcp.pop %v477
      %v482 = vrcp.pop %v480
      %v483 = vmul.f32 %v472, %v481
      %v484 = vmul.f32 %v474, %v482
      %v486 = vsel %vm462, %v483, 0
      %v489 = vsel %vm462, %v484, 0
      %491 = vmatprep.subr.mxu0 0.0
      %492 = vmatpush1.msra.mxu0 0.0
      %493 = vmatprep.subr.mxu0 0.0
      %494 = vmatpush1.msra.mxu0 0.0
      %495 = vmatprep.subr.mxu0 0.0
      %496 = vmatpush1.msra.mxu0 0.0
      %497 = vmatprep.subr.mxu0 0.0
      %498 = vmatpush1.msra.mxu0 0.0
      %499 = vmatprep.subr.mxu0 0.0
      %500 = vmatpush1.msra.mxu0 0.0
      %501 = vmatprep.subr.mxu0 0.0
      %502 = vmatpush1.msra.mxu0 0.0
      %503 = vmatprep.subr.mxu0 0.0
      %504 = vmatpush1.msra.mxu0 0.0
      %505 = vmatprep.subr.mxu0 0.0
      %506 = vmatpush1.msra.mxu0 0.0
      %507 = vmatprep.subr.mxu0 0.0
      %508 = vmatpush1.msra.mxu0 0.0
      %509 = vmatprep.subr.mxu0 0.0
      %510 = vmatpush1.msra.mxu0 0.0
      %511 = vmatprep.subr.mxu0 0.0
      %512 = vmatpush1.msra.mxu0 0.0
      %513 = vmatprep.subr.mxu0 0.0
      %514 = vmatpush1.msra.mxu0 0.0
      %515 = vmatprep.subr.mxu0 0.0
      %516 = vmatpush1.msra.mxu0 0.0
      %517 = vmatprep.subr.mxu0 0.0
      %518 = vmatpush1.msra.mxu0 0.0
      %519 = vmatprep.subr.mxu0 0.0
      %520 = vmatpush1.msra.mxu0 %v373
      %521 = vmatprep.subr.mxu0 0.0
      %522 = vmatpush1.msra.mxu0 %v372
      %523 = vmatprep.subr.mxu0 0.0
      %524 = vmatpush2.msra.mxu0 0.0
      %525 = vmatprep.subr.mxu0 0.0
      %526 = vmatpush2.msra.mxu0 0.0
      %527 = vmatprep.subr.mxu0 0.0
      %528 = vmatpush2.msra.mxu0 0.0
      %529 = vmatprep.subr.mxu0 0.0
      %530 = vmatpush2.msra.mxu0 0.0
      %531 = vmatprep.subr.mxu0 0.0
      %532 = vmatpush2.msra.mxu0 0.0
      %533 = vmatprep.subr.mxu0 0.0
      %534 = vmatpush2.msra.mxu0 0.0
      %535 = vmatprep.subr.mxu0 0.0
      %536 = vmatpush2.msra.mxu0 0.0
      %537 = vmatprep.subr.mxu0 0.0
      %538 = vmatpush2.msra.mxu0 0.0
      %539 = vmatprep.subr.mxu0 0.0
      %540 = vmatpush2.msra.mxu0 0.0
      %541 = vmatprep.subr.mxu0 0.0
      %542 = vmatpush2.msra.mxu0 0.0
      %543 = vmatprep.subr.mxu0 0.0
      %544 = vmatpush2.msra.mxu0 0.0
      %545 = vmatprep.subr.mxu0 0.0
      %546 = vmatpush2.msra.mxu0 0.0
      %547 = vmatprep.subr.mxu0 0.0
      %548 = vmatpush2.msra.mxu0 0.0
      %549 = vmatprep.subr.mxu0 0.0
      %550 = vmatpush2.msra.mxu0 0.0
      %551 = vmatprep.subr.mxu0 0.0
      %552 = vmatpush2.msra.mxu0 0.0
      %553 = vmatprep.subr.mxu0 0.0
      %554 = vmatpush2.msra.mxu0 0.0
      %555 = vmatprep.mubr.f32.mxu0 0.0
      %556 = vmatmul.mubr.f32.gmra.mxu0 %v486
      %v557 = vpop.f32.mrf.mxu0
      %v558 = vadd.f32 0.0, %v557
      %v559 = vpop.f32.mrf.mxu0
      %560 = vmatprep.mubr.f32.mxu0 0.0
      %561 = vmatmul.mubr.f32.gmra.mxu0 %v489
      %v562 = vpop.f32.mrf.mxu0
      %v563 = vadd.f32 0.0, %v562
      %v564 = vpop.f32.mrf.mxu0
      %565 = vdwg.mxu0
      %566 = vrot.lane.b32.xlu0 %v368, 120
      %v567 = vpop.permute.xlu0 %566
      %568 = vrot.lane.b32.xlu0 %v369, 120
      %v569 = vpop.permute.xlu0 %568
      %570 = vrot.lane.b32.xlu0 %v370, 120
      %v571 = vpop.permute.xlu0 %570
      %572 = vrot.lane.b32.xlu0 %v371, 120
      %v573 = vpop.permute.xlu0 %572
      %v574 = vsel %vm374, %v567, 0
      %v576 = vsel %vm374, %v569, 0
      %v578 = vsel %vm374, %v571, 0
      %v580 = vsel %vm374, %v573, 0
      %582 = vmatprep.subr.mxu0 0.0
      %583 = vmatpush1.xpose.msra.mxu0 0.0
      %584 = vmatprep.subr.mxu0 0.0
      %585 = vmatpush1.xpose.msra.mxu0 0.0
      %586 = vmatprep.subr.mxu0 0.0
      %587 = vmatpush1.xpose.msra.mxu0 0.0
      %588 = vmatprep.subr.mxu0 0.0
      %589 = vmatpush1.xpose.msra.mxu0 0.0
      %590 = vmatprep.subr.mxu0 0.0
      %591 = vmatpush1.xpose.msra.mxu0 0.0
      %592 = vmatprep.subr.mxu0 0.0
      %593 = vmatpush1.xpose.msra.mxu0 0.0
      %594 = vmatprep.subr.mxu0 0.0
      %595 = vmatpush1.xpose.msra.mxu0 0.0
      %596 = vmatprep.subr.mxu0 0.0
      %597 = vmatpush1.xpose.msra.mxu0 0.0
      %598 = vmatprep.subr.mxu0 0.0
      %599 = vmatpush1.xpose.msra.mxu0 0.0
      %600 = vmatprep.subr.mxu0 0.0
      %601 = vmatpush1.xpose.msra.mxu0 0.0
      %602 = vmatprep.subr.mxu0 0.0
      %603 = vmatpush1.xpose.msra.mxu0 0.0
      %604 = vmatprep.subr.mxu0 0.0
      %605 = vmatpush1.xpose.msra.mxu0 0.0
      %606 = vmatprep.subr.mxu0 0.0
      %607 = vmatpush1.xpose.msra.mxu0 0.0
      %608 = vmatprep.subr.mxu0 0.0
      %609 = vmatpush1.xpose.msra.mxu0 0.0
      %610 = vmatprep.subr.mxu0 0.0
      %611 = vmatpush1.xpose.msra.mxu0 %v580
      %612 = vmatprep.subr.mxu0 0.0
      %613 = vmatpush1.xpose.msra.mxu0 %v578
      %614 = vmatprep.subr.mxu0 0.0
      %615 = vmatpush2.xpose.msra.mxu0 0.0
      %616 = vmatprep.subr.mxu0 0.0
      %617 = vmatpush2.xpose.msra.mxu0 0.0
      %618 = vmatprep.subr.mxu0 0.0
      %619 = vmatpush2.xpose.msra.mxu0 0.0
      %620 = vmatprep.subr.mxu0 0.0
      %621 = vmatpush2.xpose.msra.mxu0 0.0
      %622 = vmatprep.subr.mxu0 0.0
      %623 = vmatpush2.xpose.msra.mxu0 0.0
      %624 = vmatprep.subr.mxu0 0.0
      %625 = vmatpush2.xpose.msra.mxu0 0.0
      %626 = vmatprep.subr.mxu0 0.0
      %627 = vmatpush2.xpose.msra.mxu0 0.0
      %628 = vmatprep.subr.mxu0 0.0
      %629 = vmatpush2.xpose.msra.mxu0 0.0
      %630 = vmatprep.subr.mxu0 0.0
      %631 = vmatpush2.xpose.msra.mxu0 0.0
      %632 = vmatprep.subr.mxu0 0.0
      %633 = vmatpush2.xpose.msra.mxu0 0.0
      %634 = vmatprep.subr.mxu0 0.0
      %635 = vmatpush2.xpose.msra.mxu0 0.0
      %636 = vmatprep.subr.mxu0 0.0
      %637 = vmatpush2.xpose.msra.mxu0 0.0
      %638 = vmatprep.subr.mxu0 0.0
      %639 = vmatpush2.xpose.msra.mxu0 0.0
      %640 = vmatprep.subr.mxu0 0.0
      %641 = vmatpush2.xpose.msra.mxu0 0.0
      %642 = vmatprep.subr.mxu0 0.0
      %643 = vmatpush2.xpose.msra.mxu0 0.0
      %644 = vmatprep.subr.mxu0 0.0
      %645 = vmatpush2.xpose.msra.mxu0 0.0
      %646 = vmatprep.mubr.f32.mxu0 0.0
      %647 = vmatmul.mubr.f32.gmra.mxu0 %v574
      %v648 = vpop.f32.mrf.mxu0
      %v649 = vadd.f32 0.0, %v648
      %v650 = vpop.f32.mrf.mxu0
      %651 = vmatprep.mubr.f32.mxu0 0.0
      %652 = vmatmul.mubr.f32.gmra.mxu0 %v576
      %v653 = vpop.f32.mrf.mxu0
      %v654 = vadd.f32 0.0, %v653
      %v655 = vpop.f32.mrf.mxu0
      %656 = vdwg.mxu0
      %v657 = vsel %vm462, %v649, -inf
      %658 = vmax.xlane.f32.xlu0 %v657
      %v659 = vpop.xlane.xlu0 %658
      %v660 = vsel %vm462, %v654, -inf
      %661 = vmax.xlane.f32.xlu0 %v660
      %v662 = vpop.xlane.xlu0 %661
      %v663 = vsub.f32 %v649, %v659
      %v664 = vsub.f32 %v654, %v662
      %v665 = vmul.f32 %v663, 1.442695
      %v666 = vpow.pop %v665
      %v667 = vmul.f32 %v664, 1.442695
      %v668 = vpow.pop %v667
      %v669 = vsel %vm462, %v666, 0.0
      %670 = vadd.xlane.f32.xlu0 %v669
      %v671 = vpop.xlane.xlu0 %670
      %v672 = vsel %vm462, %v668, 0.0
      %673 = vadd.xlane.f32.xlu0 %v672
      %v674 = vpop.xlane.xlu0 %673
      %v675 = vrcp.pop %v671
      %v676 = vrcp.pop %v674
      %v677 = vmul.f32 %v666, %v675
      %v678 = vmul.f32 %v668, %v676
      %681 = vrot.lane.b32.xlu0 %v372, 120
      %v682 = vpop.permute.xlu0 %681
      %683 = vrot.lane.b32.xlu0 %v373, 120
      %v684 = vpop.permute.xlu0 %683
      %v688 = vsel %vm462, %v677, 0
      %v691 = vsel %vm462, %v678, 0
      %693 = vmatprep.subr.mxu0 0.0
      %694 = vmatpush1.msra.mxu0 0.0
      %695 = vmatprep.subr.mxu0 0.0
      %696 = vmatpush1.msra.mxu0 0.0
      %697 = vmatprep.subr.mxu0 0.0
      %698 = vmatpush1.msra.mxu0 0.0
      %699 = vmatprep.subr.mxu0 0.0
      %700 = vmatpush1.msra.mxu0 0.0
      %701 = vmatprep.subr.mxu0 0.0
      %702 = vmatpush1.msra.mxu0 0.0
      %703 = vmatprep.subr.mxu0 0.0
      %704 = vmatpush1.msra.mxu0 0.0
      %705 = vmatprep.subr.mxu0 0.0
      %706 = vmatpush1.msra.mxu0 0.0
      %707 = vmatprep.subr.mxu0 0.0
      %708 = vmatpush1.msra.mxu0 0.0
      %709 = vmatprep.subr.mxu0 0.0
      %710 = vmatpush1.msra.mxu0 0.0
      %711 = vmatprep.subr.mxu0 0.0
      %712 = vmatpush1.msra.mxu0 0.0
      %713 = vmatprep.subr.mxu0 0.0
      %714 = vmatpush1.msra.mxu0 0.0
      %715 = vmatprep.subr.mxu0 0.0
      %716 = vmatpush1.msra.mxu0 0.0
      %717 = vmatprep.subr.mxu0 0.0
      %718 = vmatpush1.msra.mxu0 0.0
      %719 = vmatprep.subr.mxu0 0.0
      %720 = vmatpush1.msra.mxu0 0.0
      %721 = vmatprep.subr.mxu0 0.0
      %722 = vmatpush1.msra.mxu0 %v684
      %723 = vmatprep.subr.mxu0 0.0
      %724 = vmatpush1.msra.mxu0 %v682
      %725 = vmatprep.subr.mxu0 0.0
      %726 = vmatpush2.msra.mxu0 0.0
      %727 = vmatprep.subr.mxu0 0.0
      %728 = vmatpush2.msra.mxu0 0.0
      %729 = vmatprep.subr.mxu0 0.0
      %730 = vmatpush2.msra.mxu0 0.0
      %731 = vmatprep.subr.mxu0 0.0
      %732 = vmatpush2.msra.mxu0 0.0
      %733 = vmatprep.subr.mxu0 0.0
      %734 = vmatpush2.msra.mxu0 0.0
      %735 = vmatprep.subr.mxu0 0.0
      %736 = vmatpush2.msra.mxu0 0.0
      %737 = vmatprep.subr.mxu0 0.0
      %738 = vmatpush2.msra.mxu0 0.0
      %739 = vmatprep.subr.mxu0 0.0
      %740 = vmatpush2.msra.mxu0 0.0
      %741 = vmatprep.subr.mxu0 0.0
      %742 = vmatpush2.msra.mxu0 0.0
      %743 = vmatprep.subr.mxu0 0.0
      %744 = vmatpush2.msra.mxu0 0.0
      %745 = vmatprep.subr.mxu0 0.0
      %746 = vmatpush2.msra.mxu0 0.0
      %747 = vmatprep.subr.mxu0 0.0
      %748 = vmatpush2.msra.mxu0 0.0
      %749 = vmatprep.subr.mxu0 0.0
      %750 = vmatpush2.msra.mxu0 0.0
      %751 = vmatprep.subr.mxu0 0.0
      %752 = vmatpush2.msra.mxu0 0.0
      %753 = vmatprep.subr.mxu0 0.0
      %754 = vmatpush2.msra.mxu0 0.0
      %755 = vmatprep.subr.mxu0 0.0
      %756 = vmatpush2.msra.mxu0 0.0
      %757 = vmatprep.mubr.f32.mxu0 0.0
      %758 = vmatmul.mubr.f32.gmra.mxu0 %v688
      %v759 = vpop.f32.mrf.mxu0
      %v760 = vadd.f32 0.0, %v759
      %v761 = vpop.f32.mrf.mxu0
      %762 = vmatprep.mubr.f32.mxu0 0.0
      %763 = vmatmul.mubr.f32.gmra.mxu0 %v691
      %v764 = vpop.f32.mrf.mxu0
      %v765 = vadd.f32 0.0, %v764
      %v766 = vpop.f32.mrf.mxu0
      %767 = vdwg.mxu0
      %768 = vrot.lane.b32.xlu0 %v368, 112
      %v769 = vpop.permute.xlu0 %768
      %770 = vrot.lane.b32.xlu0 %v369, 112
      %v771 = vpop.permute.xlu0 %770
      %772 = vrot.lane.b32.xlu0 %v370, 112
      %v773 = vpop.permute.xlu0 %772
      %774 = vrot.lane.b32.xlu0 %v371, 112
      %v775 = vpop.permute.xlu0 %774
      %v776 = vsel %vm374, %v769, 0
      %v778 = vsel %vm374, %v771, 0
      %v780 = vsel %vm374, %v773, 0
      %v782 = vsel %vm374, %v775, 0
      %784 = vmatprep.subr.mxu0 0.0
      %785 = vmatpush1.xpose.msra.mxu0 0.0
      %786 = vmatprep.subr.mxu0 0.0
      %787 = vmatpush1.xpose.msra.mxu0 0.0
      %788 = vmatprep.subr.mxu0 0.0
      %789 = vmatpush1.xpose.msra.mxu0 0.0
      %790 = vmatprep.subr.mxu0 0.0
      %791 = vmatpush1.xpose.msra.mxu0 0.0
      %792 = vmatprep.subr.mxu0 0.0
      %793 = vmatpush1.xpose.msra.mxu0 0.0
      %794 = vmatprep.subr.mxu0 0.0
      %795 = vmatpush1.xpose.msra.mxu0 0.0
      %796 = vmatprep.subr.mxu0 0.0
      %797 = vmatpush1.xpose.msra.mxu0 0.0
      %798 = vmatprep.subr.mxu0 0.0
      %799 = vmatpush1.xpose.msra.mxu0 0.0
      %800 = vmatprep.subr.mxu0 0.0
      %801 = vmatpush1.xpose.msra.mxu0 0.0
      %802 = vmatprep.subr.mxu0 0.0
      %803 = vmatpush1.xpose.msra.mxu0 0.0
      %804 = vmatprep.subr.mxu0 0.0
      %805 = vmatpush1.xpose.msra.mxu0 0.0
      %806 = vmatprep.subr.mxu0 0.0
      %807 = vmatpush1.xpose.msra.mxu0 0.0
      %808 = vmatprep.subr.mxu0 0.0
      %809 = vmatpush1.xpose.msra.mxu0 0.0
      %810 = vmatprep.subr.mxu0 0.0
      %811 = vmatpush1.xpose.msra.mxu0 0.0
      %812 = vmatprep.subr.mxu0 0.0
      %813 = vmatpush1.xpose.msra.mxu0 %v782
      %814 = vmatprep.subr.mxu0 0.0
      %815 = vmatpush1.xpose.msra.mxu0 %v780
      %816 = vmatprep.subr.mxu0 0.0
      %817 = vmatpush2.xpose.msra.mxu0 0.0
      %818 = vmatprep.subr.mxu0 0.0
      %819 = vmatpush2.xpose.msra.mxu0 0.0
      %820 = vmatprep.subr.mxu0 0.0
      %821 = vmatpush2.xpose.msra.mxu0 0.0
      %822 = vmatprep.subr.mxu0 0.0
      %823 = vmatpush2.xpose.msra.mxu0 0.0
      %824 = vmatprep.subr.mxu0 0.0
      %825 = vmatpush2.xpose.msra.mxu0 0.0
      %826 = vmatprep.subr.mxu0 0.0
      %827 = vmatpush2.xpose.msra.mxu0 0.0
      %828 = vmatprep.subr.mxu0 0.0
      %829 = vmatpush2.xpose.msra.mxu0 0.0
      %830 = vmatprep.subr.mxu0 0.0
      %831 = vmatpush2.xpose.msra.mxu0 0.0
      %832 = vmatprep.subr.mxu0 0.0
      %833 = vmatpush2.xpose.msra.mxu0 0.0
      %834 = vmatprep.subr.mxu0 0.0
      %835 = vmatpush2.xpose.msra.mxu0 0.0
      %836 = vmatprep.subr.mxu0 0.0
      %837 = vmatpush2.xpose.msra.mxu0 0.0
      %838 = vmatprep.subr.mxu0 0.0
      %839 = vmatpush2.xpose.msra.mxu0 0.0
      %840 = vmatprep.subr.mxu0 0.0
      %841 = vmatpush2.xpose.msra.mxu0 0.0
      %842 = vmatprep.subr.mxu0 0.0
      %843 = vmatpush2.xpose.msra.mxu0 0.0
      %844 = vmatprep.subr.mxu0 0.0
      %845 = vmatpush2.xpose.msra.mxu0 0.0
      %846 = vmatprep.subr.mxu0 0.0
      %847 = vmatpush2.xpose.msra.mxu0 0.0
      %848 = vmatprep.mubr.f32.mxu0 0.0
      %849 = vmatmul.mubr.f32.gmra.mxu0 %v776
      %v850 = vpop.f32.mrf.mxu0
      %v851 = vadd.f32 0.0, %v850
      %v852 = vpop.f32.mrf.mxu0
      %853 = vmatprep.mubr.f32.mxu0 0.0
      %854 = vmatmul.mubr.f32.gmra.mxu0 %v778
      %v855 = vpop.f32.mrf.mxu0
      %v856 = vadd.f32 0.0, %v855
      %v857 = vpop.f32.mrf.mxu0
      %858 = vdwg.mxu0
      %v859 = vsel %vm462, %v851, -inf
      %860 = vmax.xlane.f32.xlu0 %v859
      %v861 = vpop.xlane.xlu0 %860
      %v862 = vsel %vm462, %v856, -inf
      %863 = vmax.xlane.f32.xlu0 %v862
      %v864 = vpop.xlane.xlu0 %863
      %v865 = vsub.f32 %v851, %v861
      %v866 = vsub.f32 %v856, %v864
      %v867 = vmul.f32 %v865, 1.442695
      %v868 = vpow.pop %v867
      %v869 = vmul.f32 %v866, 1.442695
      %v870 = vpow.pop %v869
      %v871 = vsel %vm462, %v868, 0.0
      %872 = vadd.xlane.f32.xlu0 %v871
      %v873 = vpop.xlane.xlu0 %872
      %v874 = vsel %vm462, %v870, 0.0
      %875 = vadd.xlane.f32.xlu0 %v874
      %v876 = vpop.xlane.xlu0 %875
      %v877 = vrcp.pop %v873
      %v878 = vrcp.pop %v876
      %v879 = vmul.f32 %v868, %v877
      %v880 = vmul.f32 %v870, %v878
      %881 = vrot.lane.b32.xlu0 %v372, 112
      %v882 = vpop.permute.xlu0 %881
      %883 = vrot.lane.b32.xlu0 %v373, 112
      %v884 = vpop.permute.xlu0 %883
      %v888 = vsel %vm462, %v879, 0
      %v891 = vsel %vm462, %v880, 0
      %893 = vmatprep.subr.mxu0 0.0
      %894 = vmatpush1.msra.mxu0 0.0
      %895 = vmatprep.subr.mxu0 0.0
      %896 = vmatpush1.msra.mxu0 0.0
      %897 = vmatprep.subr.mxu0 0.0
      %898 = vmatpush1.msra.mxu0 0.0
      %899 = vmatprep.subr.mxu0 0.0
      %900 = vmatpush1.msra.mxu0 0.0
      %901 = vmatprep.subr.mxu0 0.0
      %902 = vmatpush1.msra.mxu0 0.0
      %903 = vmatprep.subr.mxu0 0.0
      %904 = vmatpush1.msra.mxu0 0.0
      %905 = vmatprep.subr.mxu0 0.0
      %906 = vmatpush1.msra.mxu0 0.0
      %907 = vmatprep.subr.mxu0 0.0
      %908 = vmatpush1.msra.mxu0 0.0
      %909 = vmatprep.subr.mxu0 0.0
      %910 = vmatpush1.msra.mxu0 0.0
      %911 = vmatprep.subr.mxu0 0.0
      %912 = vmatpush1.msra.mxu0 0.0
      %913 = vmatprep.subr.mxu0 0.0
      %914 = vmatpush1.msra.mxu0 0.0
      %915 = vmatprep.subr.mxu0 0.0
      %916 = vmatpush1.msra.mxu0 0.0
      %917 = vmatprep.subr.mxu0 0.0
      %918 = vmatpush1.msra.mxu0 0.0
      %919 = vmatprep.subr.mxu0 0.0
      %920 = vmatpush1.msra.mxu0 0.0
      %921 = vmatprep.subr.mxu0 0.0
      %922 = vmatpush1.msra.mxu0 %v884
      %923 = vmatprep.subr.mxu0 0.0
      %924 = vmatpush1.msra.mxu0 %v882
      %925 = vmatprep.subr.mxu0 0.0
      %926 = vmatpush2.msra.mxu0 0.0
      %927 = vmatprep.subr.mxu0 0.0
      %928 = vmatpush2.msra.mxu0 0.0
      %929 = vmatprep.subr.mxu0 0.0
      %930 = vmatpush2.msra.mxu0 0.0
      %931 = vmatprep.subr.mxu0 0.0
      %932 = vmatpush2.msra.mxu0 0.0
      %933 = vmatprep.subr.mxu0 0.0
      %934 = vmatpush2.msra.mxu0 0.0
      %935 = vmatprep.subr.mxu0 0.0
      %936 = vmatpush2.msra.mxu0 0.0
      %937 = vmatprep.subr.mxu0 0.0
      %938 = vmatpush2.msra.mxu0 0.0
      %939 = vmatprep.subr.mxu0 0.0
      %940 = vmatpush2.msra.mxu0 0.0
      %941 = vmatprep.subr.mxu0 0.0
      %942 = vmatpush2.msra.mxu0 0.0
      %943 = vmatprep.subr.mxu0 0.0
      %944 = vmatpush2.msra.mxu0 0.0
      %945 = vmatprep.subr.mxu0 0.0
      %946 = vmatpush2.msra.mxu0 0.0
      %947 = vmatprep.subr.mxu0 0.0
      %948 = vmatpush2.msra.mxu0 0.0
      %949 = vmatprep.subr.mxu0 0.0
      %950 = vmatpush2.msra.mxu0 0.0
      %951 = vmatprep.subr.mxu0 0.0
      %952 = vmatpush2.msra.mxu0 0.0
      %953 = vmatprep.subr.mxu0 0.0
      %954 = vmatpush2.msra.mxu0 0.0
      %955 = vmatprep.subr.mxu0 0.0
      %956 = vmatpush2.msra.mxu0 0.0
      %957 = vmatprep.mubr.f32.mxu0 0.0
      %958 = vmatmul.mubr.f32.gmra.mxu0 %v888
      %v959 = vpop.f32.mrf.mxu0
      %v960 = vadd.f32 0.0, %v959
      %v961 = vpop.f32.mrf.mxu0
      %962 = vmatprep.mubr.f32.mxu0 0.0
      %963 = vmatmul.mubr.f32.gmra.mxu0 %v891
      %v964 = vpop.f32.mrf.mxu0
      %v965 = vadd.f32 0.0, %v964
      %v966 = vpop.f32.mrf.mxu0
      %967 = vdwg.mxu0
      %968 = vrot.lane.b32.xlu0 %v368, 104
      %v969 = vpop.permute.xlu0 %968
      %970 = vrot.lane.b32.xlu0 %v369, 104
      %v971 = vpop.permute.xlu0 %970
      %972 = vrot.lane.b32.xlu0 %v370, 104
      %v973 = vpop.permute.xlu0 %972
      %974 = vrot.lane.b32.xlu0 %v371, 104
      %v975 = vpop.permute.xlu0 %974
      %v976 = vsel %vm374, %v969, 0
      %v978 = vsel %vm374, %v971, 0
      %v980 = vsel %vm374, %v973, 0
      %v982 = vsel %vm374, %v975, 0
      %984 = vmatprep.subr.mxu0 0.0
      %985 = vmatpush1.xpose.msra.mxu0 0.0
      %986 = vmatprep.subr.mxu0 0.0
      %987 = vmatpush1.xpose.msra.mxu0 0.0
      %988 = vmatprep.subr.mxu0 0.0
      %989 = vmatpush1.xpose.msra.mxu0 0.0
      %990 = vmatprep.subr.mxu0 0.0
      %991 = vmatpush1.xpose.msra.mxu0 0.0
      %992 = vmatprep.subr.mxu0 0.0
      %993 = vmatpush1.xpose.msra.mxu0 0.0
      %994 = vmatprep.subr.mxu0 0.0
      %995 = vmatpush1.xpose.msra.mxu0 0.0
      %996 = vmatprep.subr.mxu0 0.0
      %997 = vmatpush1.xpose.msra.mxu0 0.0
      %998 = vmatprep.subr.mxu0 0.0
      %999 = vmatpush1.xpose.msra.mxu0 0.0
      %1000 = vmatprep.subr.mxu0 0.0
      %1001 = vmatpush1.xpose.msra.mxu0 0.0
      %1002 = vmatprep.subr.mxu0 0.0
      %1003 = vmatpush1.xpose.msra.mxu0 0.0
      %1004 = vmatprep.subr.mxu0 0.0
      %1005 = vmatpush1.xpose.msra.mxu0 0.0
      %1006 = vmatprep.subr.mxu0 0.0
      %1007 = vmatpush1.xpose.msra.mxu0 0.0
      %1008 = vmatprep.subr.mxu0 0.0
      %1009 = vmatpush1.xpose.msra.mxu0 0.0
      %1010 = vmatprep.subr.mxu0 0.0
      %1011 = vmatpush1.xpose.msra.mxu0 0.0
      %1012 = vmatprep.subr.mxu0 0.0
      %1013 = vmatpush1.xpose.msra.mxu0 %v982
      %1014 = vmatprep.subr.mxu0 0.0
      %1015 = vmatpush1.xpose.msra.mxu0 %v980
      %1016 = vmatprep.subr.mxu0 0.0
      %1017 = vmatpush2.xpose.msra.mxu0 0.0
      %1018 = vmatprep.subr.mxu0 0.0
      %1019 = vmatpush2.xpose.msra.mxu0 0.0
      %1020 = vmatprep.subr.mxu0 0.0
      %1021 = vmatpush2.xpose.msra.mxu0 0.0
      %1022 = vmatprep.subr.mxu0 0.0
      %1023 = vmatpush2.xpose.msra.mxu0 0.0
      %1024 = vmatprep.subr.mxu0 0.0
      %1025 = vmatpush2.xpose.msra.mxu0 0.0
      %1026 = vmatprep.subr.mxu0 0.0
      %1027 = vmatpush2.xpose.msra.mxu0 0.0
      %1028 = vmatprep.subr.mxu0 0.0
      %1029 = vmatpush2.xpose.msra.mxu0 0.0
      %1030 = vmatprep.subr.mxu0 0.0
      %1031 = vmatpush2.xpose.msra.mxu0 0.0
      %1032 = vmatprep.subr.mxu0 0.0
      %1033 = vmatpush2.xpose.msra.mxu0 0.0
      %1034 = vmatprep.subr.mxu0 0.0
      %1035 = vmatpush2.xpose.msra.mxu0 0.0
      %1036 = vmatprep.subr.mxu0 0.0
      %1037 = vmatpush2.xpose.msra.mxu0 0.0
      %1038 = vmatprep.subr.mxu0 0.0
      %1039 = vmatpush2.xpose.msra.mxu0 0.0
      %1040 = vmatprep.subr.mxu0 0.0
      %1041 = vmatpush2.xpose.msra.mxu0 0.0
      %1042 = vmatprep.subr.mxu0 0.0
      %1043 = vmatpush2.xpose.msra.mxu0 0.0
      %1044 = vmatprep.subr.mxu0 0.0
      %1045 = vmatpush2.xpose.msra.mxu0 0.0
      %1046 = vmatprep.subr.mxu0 0.0
      %1047 = vmatpush2.xpose.msra.mxu0 0.0
      %1048 = vmatprep.mubr.f32.mxu0 0.0
      %1049 = vmatmul.mubr.f32.gmra.mxu0 %v976
      %v1050 = vpop.f32.mrf.mxu0
      %v1051 = vadd.f32 0.0, %v1050
      %v1052 = vpop.f32.mrf.mxu0
      %1053 = vmatprep.mubr.f32.mxu0 0.0
      %1054 = vmatmul.mubr.f32.gmra.mxu0 %v978
      %v1055 = vpop.f32.mrf.mxu0
      %v1056 = vadd.f32 0.0, %v1055
      %v1057 = vpop.f32.mrf.mxu0
      %1058 = vdwg.mxu0
      %v1059 = vsel %vm462, %v1051, -inf
      %1060 = vmax.xlane.f32.xlu0 %v1059
      %v1061 = vpop.xlane.xlu0 %1060
      %v1062 = vsel %vm462, %v1056, -inf
      %1063 = vmax.xlane.f32.xlu0 %v1062
      %v1064 = vpop.xlane.xlu0 %1063
      %v1065 = vsub.f32 %v1051, %v1061
      %v1066 = vsub.f32 %v1056, %v1064
      %v1067 = vmul.f32 %v1065, 1.442695
      %v1068 = vpow.pop %v1067
      %v1069 = vmul.f32 %v1066, 1.442695
      %v1070 = vpow.pop %v1069
      %v1071 = vsel %vm462, %v1068, 0.0
      %1072 = vadd.xlane.f32.xlu0 %v1071
      %v1073 = vpop.xlane.xlu0 %1072
      %v1074 = vsel %vm462, %v1070, 0.0
      %1075 = vadd.xlane.f32.xlu0 %v1074
      %v1076 = vpop.xlane.xlu0 %1075
      %v1077 = vrcp.pop %v1073
      %v1078 = vrcp.pop %v1076
      %v1079 = vmul.f32 %v1068, %v1077
      %v1080 = vmul.f32 %v1070, %v1078
      %1081 = vrot.lane.b32.xlu0 %v372, 104
      %v1082 = vpop.permute.xlu0 %1081
      %1083 = vrot.lane.b32.xlu0 %v373, 104
      %v1084 = vpop.permute.xlu0 %1083
      %v1088 = vsel %vm462, %v1079, 0
      %v1091 = vsel %vm462, %v1080, 0
      %1093 = vmatprep.subr.mxu0 0.0
      %1094 = vmatpush1.msra.mxu0 0.0
      %1095 = vmatprep.subr.mxu0 0.0
      %1096 = vmatpush1.msra.mxu0 0.0
      %1097 = vmatprep.subr.mxu0 0.0
      %1098 = vmatpush1.msra.mxu0 0.0
      %1099 = vmatprep.subr.mxu0 0.0
      %1100 = vmatpush1.msra.mxu0 0.0
      %1101 = vmatprep.subr.mxu0 0.0
      %1102 = vmatpush1.msra.mxu0 0.0
      %1103 = vmatprep.subr.mxu0 0.0
      %1104 = vmatpush1.msra.mxu0 0.0
      %1105 = vmatprep.subr.mxu0 0.0
      %1106 = vmatpush1.msra.mxu0 0.0
      %1107 = vmatprep.subr.mxu0 0.0
      %1108 = vmatpush1.msra.mxu0 0.0
      %1109 = vmatprep.subr.mxu0 0.0
      %1110 = vmatpush1.msra.mxu0 0.0
      %1111 = vmatprep.subr.mxu0 0.0
      %1112 = vmatpush1.msra.mxu0 0.0
      %1113 = vmatprep.subr.mxu0 0.0
      %1114 = vmatpush1.msra.mxu0 0.0
      %1115 = vmatprep.subr.mxu0 0.0
      %1116 = vmatpush1.msra.mxu0 0.0
      %1117 = vmatprep.subr.mxu0 0.0
      %1118 = vmatpush1.msra.mxu0 0.0
      %1119 = vmatprep.subr.mxu0 0.0
      %1120 = vmatpush1.msra.mxu0 0.0
      %1121 = vmatprep.subr.mxu0 0.0
      %1122 = vmatpush1.msra.mxu0 %v1084
      %1123 = vmatprep.subr.mxu0 0.0
      %1124 = vmatpush1.msra.mxu0 %v1082
      %1125 = vmatprep.subr.mxu0 0.0
      %1126 = vmatpush2.msra.mxu0 0.0
      %1127 = vmatprep.subr.mxu0 0.0
      %1128 = vmatpush2.msra.mxu0 0.0
      %1129 = vmatprep.subr.mxu0 0.0
      %1130 = vmatpush2.msra.mxu0 0.0
      %1131 = vmatprep.subr.mxu0 0.0
      %1132 = vmatpush2.msra.mxu0 0.0
      %1133 = vmatprep.subr.mxu0 0.0
      %1134 = vmatpush2.msra.mxu0 0.0
      %1135 = vmatprep.subr.mxu0 0.0
      %1136 = vmatpush2.msra.mxu0 0.0
      %1137 = vmatprep.subr.mxu0 0.0
      %1138 = vmatpush2.msra.mxu0 0.0
      %1139 = vmatprep.subr.mxu0 0.0
      %1140 = vmatpush2.msra.mxu0 0.0
      %1141 = vmatprep.subr.mxu0 0.0
      %1142 = vmatpush2.msra.mxu0 0.0
      %1143 = vmatprep.subr.mxu0 0.0
      %1144 = vmatpush2.msra.mxu0 0.0
      %1145 = vmatprep.subr.mxu0 0.0
      %1146 = vmatpush2.msra.mxu0 0.0
      %1147 = vmatprep.subr.mxu0 0.0
      %1148 = vmatpush2.msra.mxu0 0.0
      %1149 = vmatprep.subr.mxu0 0.0
      %1150 = vmatpush2.msra.mxu0 0.0
      %1151 = vmatprep.subr.mxu0 0.0
      %1152 = vmatpush2.msra.mxu0 0.0
      %1153 = vmatprep.subr.mxu0 0.0
      %1154 = vmatpush2.msra.mxu0 0.0
      %1155 = vmatprep.subr.mxu0 0.0
      %1156 = vmatpush2.msra.mxu0 0.0
      %1157 = vmatprep.mubr.f32.mxu0 0.0
      %1158 = vmatmul.mubr.f32.gmra.mxu0 %v1088
      %v1159 = vpop.f32.mrf.mxu0
      %v1160 = vadd.f32 0.0, %v1159
      %v1161 = vpop.f32.mrf.mxu0
      %1162 = vmatprep.mubr.f32.mxu0 0.0
      %1163 = vmatmul.mubr.f32.gmra.mxu0 %v1091
      %v1164 = vpop.f32.mrf.mxu0
      %v1165 = vadd.f32 0.0, %v1164
      %v1166 = vpop.f32.mrf.mxu0
      %1167 = vdwg.mxu0
      %1170 = vrot.lane.b32.xlu0 %v760, 8
      %v1171 = vpop.permute.xlu0 %1170
      %1172 = vrot.lane.b32.xlu0 %v765, 8
      %v1173 = vpop.permute.xlu0 %1172
      %1178 = vrot.lane.b32.xlu0 %v960, 16
      %v1179 = vpop.permute.xlu0 %1178
      %1180 = vrot.lane.b32.xlu0 %v965, 16
      %v1181 = vpop.permute.xlu0 %1180
      %1186 = vrot.lane.b32.xlu0 %v1160, 24
      %v1187 = vpop.permute.xlu0 %1186
      %1188 = vrot.lane.b32.xlu0 %v1165, 24
      %v1189 = vpop.permute.xlu0 %1188
      %v1192 = vsel %vm374, %v558, %v1171
      %v1193 = vsel %vm374, %v563, %v1173
      %v1194 = vsel %vm462, %v1192, %v1179
      %v1195 = vsel %vm462, %v1193, %v1181
      %vm1196 = vcmask 195584
      %v1197 = vsel %vm1196, %v1194, %v1187
      %v1198 = vsel %vm1196, %v1195, %v1189
      %v1199 = vld [vmem:[%s4] sm:$0xff]
      %v1200 = vld [vmem:[%s4 + $0x8] sm:$0xff]
      %v1201 = vld [vmem:[%s4 + $0x10] sm:$0xff]
      %v1202 = vld [vmem:[%s4 + $0x18] sm:$0xff]
      %v1203 = vld [vmem:[%s5] sm:$0x1]
      %v1205 = vlaneseq
      %v1206 = vshrl.u32 %v1205, 7
      %v1207 = vsub.s32 0, %v1206
      %v1208 = vrot.slane %v1203, %v1207
      %vm1210 = vcmask 261120
      %v1212 = vsel %vm1210, %v1197, 0
      %v1215 = vsel %vm1210, %v1198, 0
      %1217 = vmatprep.subr.mxu0 0.0
      %1218 = vmatpush1.msra.mxu0 0.0
      %1219 = vmatprep.subr.mxu0 0.0
      %1220 = vmatpush1.msra.mxu0 0.0
      %1221 = vmatprep.subr.mxu0 0.0
      %1222 = vmatpush1.msra.mxu0 0.0
      %1223 = vmatprep.subr.mxu0 0.0
      %1224 = vmatpush1.msra.mxu0 0.0
      %1225 = vmatprep.subr.mxu0 0.0
      %1226 = vmatpush1.msra.mxu0 0.0
      %1227 = vmatprep.subr.mxu0 0.0
      %1228 = vmatpush1.msra.mxu0 0.0
      %1229 = vmatprep.subr.mxu0 0.0
      %1230 = vmatpush1.msra.mxu0 0.0
      %1231 = vmatprep.subr.mxu0 0.0
      %1232 = vmatpush1.msra.mxu0 0.0
      %1233 = vmatprep.subr.mxu0 0.0
      %1234 = vmatpush1.msra.mxu0 0.0
      %1235 = vmatprep.subr.mxu0 0.0
      %1236 = vmatpush1.msra.mxu0 0.0
      %1237 = vmatprep.subr.mxu0 0.0
      %1238 = vmatpush1.msra.mxu0 0.0
      %1239 = vmatprep.subr.mxu0 0.0
      %1240 = vmatpush1.msra.mxu0 0.0
      %1241 = vmatprep.subr.mxu0 0.0
      %1242 = vmatpush1.msra.mxu0 %v1202
      %1243 = vmatprep.subr.mxu0 0.0
      %1244 = vmatpush1.msra.mxu0 %v1201
      %1245 = vmatprep.subr.mxu0 0.0
      %1246 = vmatpush1.msra.mxu0 %v1200
      %1247 = vmatprep.subr.mxu0 0.0
      %1248 = vmatpush1.msra.mxu0 %v1199
      %1249 = vmatprep.subr.mxu0 0.0
      %1250 = vmatpush2.msra.mxu0 0.0
      %1251 = vmatprep.subr.mxu0 0.0
      %1252 = vmatpush2.msra.mxu0 0.0
      %1253 = vmatprep.subr.mxu0 0.0
      %1254 = vmatpush2.msra.mxu0 0.0
      %1255 = vmatprep.subr.mxu0 0.0
      %1256 = vmatpush2.msra.mxu0 0.0
      %1257 = vmatprep.subr.mxu0 0.0
      %1258 = vmatpush2.msra.mxu0 0.0
      %1259 = vmatprep.subr.mxu0 0.0
      %1260 = vmatpush2.msra.mxu0 0.0
      %1261 = vmatprep.subr.mxu0 0.0
      %1262 = vmatpush2.msra.mxu0 0.0
      %1263 = vmatprep.subr.mxu0 0.0
      %1264 = vmatpush2.msra.mxu0 0.0
      %1265 = vmatprep.subr.mxu0 0.0
      %1266 = vmatpush2.msra.mxu0 0.0
      %1267 = vmatprep.subr.mxu0 0.0
      %1268 = vmatpush2.msra.mxu0 0.0
      %1269 = vmatprep.subr.mxu0 0.0
      %1270 = vmatpush2.msra.mxu0 0.0
      %1271 = vmatprep.subr.mxu0 0.0
      %1272 = vmatpush2.msra.mxu0 0.0
      %1273 = vmatprep.subr.mxu0 0.0
      %1274 = vmatpush2.msra.mxu0 0.0
      %1275 = vmatprep.subr.mxu0 0.0
      %1276 = vmatpush2.msra.mxu0 0.0
      %1277 = vmatprep.subr.mxu0 0.0
      %1278 = vmatpush2.msra.mxu0 0.0
      %1279 = vmatprep.subr.mxu0 0.0
      %1280 = vmatpush2.msra.mxu0 0.0
      %1281 = vmatprep.mubr.f32.mxu0 0.0
      %1282 = vmatmul.mubr.f32.gmra.mxu0 %v1212
      %v1283 = vpop.f32.mrf.mxu0
      %v1284 = vadd.f32 %v1208, %v1283
      %v1285 = vpop.f32.mrf.mxu0
      %1286 = vmatprep.mubr.f32.mxu0 0.0
      %1287 = vmatmul.mubr.f32.gmra.mxu0 %v1215
      %v1288 = vpop.f32.mrf.mxu0
      %v1289 = vadd.f32 %v1208, %v1288
      %v1290 = vpop.f32.mrf.mxu0
      %1291 = vdwg.mxu0
      %v1292 = vld [vmem:[%s360] sm:$0xff]
      %v1293 = vld [vmem:[%s360 + $0x8] sm:$0xff]
      %v1294 = vadd.f32 %v1292, %v1284
      %v1295 = vadd.f32 %v1293, %v1289
      %v1296 = vsel %vm1210, %v1294, 0.0
      %1297 = vadd.xlane.f32.xlu0 %v1296
      %v1298 = vpop.xlane.xlu0 %1297
      %v1299 = vsel %vm1210, %v1295, 0.0
      %1300 = vadd.xlane.f32.xlu0 %v1299
      %v1301 = vpop.xlane.xlu0 %1300
      %v1302 = vrcp.pop 32.0
      %v1303 = vmul.f32 %v1298, %v1302
      %v1304 = vmul.f32 %v1301, %v1302
      %v1305 = vsub.f32 %v1294, %v1303
      %v1306 = vsub.f32 %v1295, %v1304
      %v1307 = vmul.f32 %v1305, %v1305
      %v1308 = vmul.f32 %v1306, %v1306
      %v1309 = vsel %vm1210, %v1307, 0.0
      %1310 = vadd.xlane.f32.xlu0 %v1309
      %v1311 = vpop.xlane.xlu0 %1310
      %v1312 = vsel %vm1210, %v1308, 0.0
      %1313 = vadd.xlane.f32.xlu0 %v1312
      %v1314 = vpop.xlane.xlu0 %1313
      %v1315 = vmul.f32 %v1311, %v1302
      %v1316 = vmul.f32 %v1314, %v1302
      %v1317 = vadd.f32 %v1315, 1e-05
      %v1318 = vadd.f32 %v1316, 1e-05
      %v1319 = vrsqrt.pop %v1317
      %v1320 = vrsqrt.pop %v1318
      %v1321 = vmul.f32 %v1305, %v1319
      %v1322 = vmul.f32 %v1306, %v1320
      %v1323 = vld [vmem:[%s6] sm:$0x1]
      %v1325 = vlaneseq
      %v1326 = vshrl.u32 %v1325, 7
      %v1327 = vsub.s32 0, %v1326
      %v1328 = vrot.slane %v1323, %v1327
      %v1330 = vmul.f32 %v1321, %v1328
      %v1331 = vmul.f32 %v1322, %v1328
      %v1332 = vld [vmem:[%s7] sm:$0x1]
      %v1334 = vlaneseq
      %v1335 = vshrl.u32 %v1334, 7
      %v1336 = vsub.s32 0, %v1335
      %v1337 = vrot.slane %v1332, %v1336
      %v1339 = vadd.f32 %v1330, %v1337
      %v1340 = vadd.f32 %v1331, %v1337
      %1341 = vst.msk [vmem:[%s365] sm:$0xff] %vm1210, %v1339
      %1342 = vst.msk [vmem:[%s365 + $0x8] sm:$0xff] %vm1210, %v1340
      %p1343 = scmp.lt.s32.totalorder %s19, 1
      %s1344 = scalar_select %p1343, %s19, 1
      %s1345 = smul.addr %s1344, 2
      %s1346 = smul.addr %s1345, 8
      %s1347 = scalar_lea.vmem %s8, %s1346
      // Predicated region
      $region53: #{transformer_encoder.7} parent=51 // pred_check
        %p1348 = pneg %p225
      $region54: #{transformer_encoder.7} parent=51 // pred_check_branch
        %1350 = sbr.rel (%p1348) target = $region56
      $region55: #{transformer_encoder.7} parent=51 // pred_region
        _
      $region56: #{transformer_encoder.7} parent=51 // pred_fallthru
        _
    $region52: #{transformer_encoder.7} parent=5 // pred_fallthru
      _
    %p1351 = scmp.le.s32.totalorder 2, %s14
    // Predicated region
    $region57: #{transformer_encoder.7} parent=5 // pred_check
      %p1352 = pneg %p1351
    $region58: #{transformer_encoder.7} parent=5 // pred_check_branch
      %1354 = sbr.rel (%p1352) target = $region60
    $region59: #{transformer_encoder.7} parent=5 // pred_region
      %s1355 = ssub.s32 %s14, 2
      // Predicated region
      $region61: #{transformer_encoder.7} parent=59 // pred_check
        %p1356 = pneg %p231
      $region62: #{transformer_encoder.7} parent=59 // pred_check_branch
        %1358 = sbr.rel (%p1356) target = $region64
      $region63: #{transformer_encoder.7} parent=59 // pred_region
        %p1359 = scmp.lt.s32.totalorder %s20, 1
        %s1360 = scalar_select %p1359, %s20, 1
        %s1361 = smul.addr %s1360, 2
        %s1362 = smul.addr %s1361, 8
        %s1363 = scalar_lea.vmem %s8, %s1362
      $region64: #{transformer_encoder.7} parent=59 // pred_fallthru
        _
    $region60: #{transformer_encoder.7} parent=5 // pred_fallthru
      _
  $region6: #{transformer_encoder.7} parent=0 // loop_footer
    %s18 = sadd.s32 1, %s14
  $region7: #{transformer_encoder.7} parent=0 // loop_footer_branch
    %13 = sbr.rel target = $region3
  $region8: #{transformer_encoder.7} parent=0 // loop_exit
    _

</llo_original>
